<compile_context>
chip_gen: v6e
topology: v6e:2x2x1
jax: 0.10.0
libtpu: 0.0.40
codegen_flags: <defaults>
</compile_context>

<pallas_src>
import functools

import jax
import jax.numpy as jnp
from jax.experimental import pallas as pl
from jax.experimental.pallas import tpu as pltpu

K = 7                  # conv kernel size
PAD = K // 2           # conv padding


def _round_up(x, m):
    return (x + m - 1) // m * m


def _vmem_budget_bytes():
    """Generation-aware VMEM budget: ~48 MiB on v7x, ~96 MiB on v5e/v6e."""
    cap = 64 * 1024 * 1024                      # conservative default (v7x TC)
    try:
        info = pltpu.get_tpu_info()
        cap = int(getattr(info, "vmem_capacity_bytes", cap))
    except Exception:
        pass
    return max(16 << 20, min(cap * 3 // 4, 112 << 20))


def _pick_c_block(C, L, x_itemsize, Lpad, budget):
    """Largest channel slab that keeps the double-buffered pipeline in budget."""
    fixed = (2 * _round_up(L, 128) * x_itemsize      # output double buffer
             + 2 * _round_up(L, 128) * 4             # column-id vector
             + 2 * 2 * K * K * 4                     # weights
             + 2 * Lpad * 4                          # conv/reduce scratch
             + (4 << 20))                            # compiler-internal headroom
    avail = budget - fixed
    per_c = 2 * _round_up(L, 128) * x_itemsize       # x double buffer per channel
    max_cb = max(1, avail // per_c) if avail > 0 else 1
    if C <= max_cb:
        return C, False                              # whole C in one grid step
    cb8 = max(8, (int(max_cb) // 8) * 8)             # block second-minor: 8-aligned
    # Prefer an exact divisor of C (multiple of 8) if it is not much smaller.
    best_div, d = 0, (min(cb8, C) // 8) * 8
    while d >= 8:
        if C % d == 0:
            best_div = d
            break
        d -= 8
    if best_div >= max(8, cb8 // 2):
        return best_div, False
    return cb8, (C % cb8 != 0)                       # ragged: mask last block


def _sa_kernel(w_ref, b_ref, col_ref, x_ref, o_ref, red_ref, *,
               C, W, L, OFF, Lpad, ragged):
    """Fused channel reduce + 7x7 conv + bias + sigmoid for one batch element.

    w_ref  : (2, K*K) f32 VMEM   conv weights (avg-plane row pre-scaled by 1/C)
    b_ref  : (1,)     f32 SMEM   conv bias
    col_ref: (1, L)   i32 VMEM   column index (flat_idx % W) per output lane
    x_ref  : (1, c_blk, L)       input block (one batch, one channel slab)
    o_ref  : (1, 1, L)           output block (written on the last channel step)
    red_ref: (2, Lpad) f32 VMEM  zero-haloed planes; row 0 = running max,
                                 row 1 = running sum, interior at [OFF, OFF+L)
    """
    c_step = pl.program_id(1)
    c_blk = x_ref.shape[1]

    xb = x_ref[0]                                      # (c_blk, L)
    if ragged:
        rem = C - c_step * c_blk                       # valid channels this block
        rows = jax.lax.broadcasted_iota(jnp.int32, (c_blk, L), 0)
        valid = rows < rem
        xf = xb.astype(jnp.float32)
        blk_max = jnp.max(jnp.where(valid, xf, -jnp.inf), axis=0, keepdims=True)
        blk_sum = jnp.sum(jnp.where(valid, xf, 0.0), axis=0, keepdims=True)
    else:
        if xb.dtype == jnp.bfloat16:                   # bf16 max is exact
            blk_max = jnp.max(xb, axis=0, keepdims=True).astype(jnp.float32)
        else:
            blk_max = jnp.max(xb.astype(jnp.float32), axis=0, keepdims=True)
        blk_sum = jnp.sum(xb.astype(jnp.float32), axis=0, keepdims=True)

    @pl.when(c_step == 0)
    def _init():
        # Zero only the halos; the interior is fully overwritten below.
        red_ref[:, 0:OFF] = jnp.zeros((2, OFF), jnp.float32)
        red_ref[:, OFF + L:Lpad] = jnp.zeros((2, Lpad - OFF - L), jnp.float32)
        red_ref[0:1, OFF:OFF + L] = blk_max
        red_ref[1:2, OFF:OFF + L] = blk_sum

    @pl.when(c_step > 0)
    def _accumulate():
        red_ref[0:1, OFF:OFF + L] = jnp.maximum(red_ref[0:1, OFF:OFF + L], blk_max)
        red_ref[1:2, OFF:OFF + L] = red_ref[1:2, OFF:OFF + L] + blk_sum

    @pl.when(c_step == pl.num_programs(1) - 1)
    def _finalize():
        col = col_ref[...]                             # (1, L) int32
        masks = {}
        for d in range(-PAD, PAD + 1):
            if d == 0:
                continue
            masks[d] = (col >= -d) if d < 0 else (col < (W - d))

        # 49 fully-unrolled taps: each is a lane-dense (2, L) static slice of the
        # zero-haloed planes; both planes MAC in the same vregs via the (2, 1)
        # weight column.  Out-of-row columns are zeroed by the per-kw mask,
        # out-of-image rows read the zero halo.
        acc = jnp.zeros((2, L), jnp.float32)
        for kh in range(K):
            for kw in range(K):
                d = kw - PAD
                start = OFF + (kh - PAD) * W + d
                tap = red_ref[:, start:start + L]      # (2, L)
                if d != 0:
                    tap = jnp.where(masks[d], tap, 0.0)
                t = kh * K + kw
                acc = acc + w_ref[:, t:t + 1] * tap

        res = jnp.sum(acc, axis=0, keepdims=True)      # (1, L): max-plane + avg-plane
        out = jax.nn.sigmoid(res + b_ref[0])
        o_ref[0] = out.astype(o_ref.dtype)


def spatial_attention(x, weight, bias, *, c_block=None):
    """x: (B, C, H, W); weight: (1, 2, K, K); bias: (1,). Returns (B, 1, H, W)."""
    B, C, H, W = x.shape
    assert weight.shape == (1, 2, K, K) and bias.shape == (1,)
    assert W >= 3, "flat-layout column masking assumes W >= 3"

    L = H * W
    maxs = PAD * W + PAD                       # max |flat tap offset|
    OFF = _round_up(maxs, 128)                 # lane-aligned interior start
    Lpad = _round_up(OFF + L + maxs, 128)

    budget = _vmem_budget_bytes()
    x_itemsize = jnp.dtype(x.dtype).itemsize
    if c_block is None:
        c_block, ragged = _pick_c_block(C, L, x_itemsize, Lpad, budget)
    else:
        c_block = min(int(c_block), C)
        assert c_block == C or c_block % 8 == 0, (C, c_block)
        ragged = (C % c_block != 0)
    c_block = min(c_block, C)
    ragged = (C % c_block != 0)
    nc = pl.cdiv(C, c_block)

    x_flat = x.reshape(B, C, L)                                 # free relayout
    w_eff = weight.reshape(2, K * K).astype(jnp.float32)
    w_eff = w_eff * jnp.array([[1.0], [1.0 / C]], jnp.float32)  # fold mean scale
    b_smem = bias.reshape(1).astype(jnp.float32)
    col_ids = (jnp.arange(L, dtype=jnp.int32) % W).reshape(1, L)

    kernel = functools.partial(_sa_kernel, C=C, W=W, L=L, OFF=OFF, Lpad=Lpad,
                               ragged=ragged)
    out_flat = pl.pallas_call(
        kernel,
        out_shape=jax.ShapeDtypeStruct((B, 1, L), x.dtype),
        grid=(B, nc),
        in_specs=[
            pl.BlockSpec((2, K * K), lambda b, c: (0, 0)),          # weights
            pl.BlockSpec(memory_space=pltpu.MemorySpace.SMEM),      # bias
            pl.BlockSpec((1, L), lambda b, c: (0, 0)),              # column ids
            pl.BlockSpec((1, c_block, L), lambda b, c: (b, c, 0)),  # x slab
        ],
        out_specs=pl.BlockSpec((1, 1, L), lambda b, c: (b, 0, 0)),
        scratch_shapes=[
            pltpu.VMEM((2, Lpad), jnp.float32),    # zero-haloed max/sum planes
        ],
        compiler_params=pltpu.CompilerParams(
            dimension_semantics=("parallel", "arbitrary"),
            vmem_limit_bytes=int(budget),
        ),
    )(w_eff, b_smem, col_ids, x_flat)
    return out_flat.reshape(B, 1, H, W)


def reference(x, weight, bias):
    """Pure-JAX reference matching the PyTorch module."""
    max_r = jnp.max(x, axis=1, keepdims=True)
    avg_r = jnp.mean(x, axis=1, keepdims=True)
    res = jnp.concatenate([max_r, avg_r], axis=1)
    out = jax.lax.conv_general_dilated(
        res.astype(jnp.float32), weight.astype(jnp.float32),
        window_strides=(1, 1), padding=((PAD, PAD), (PAD, PAD)),
        dimension_numbers=("NCHW", "OIHW", "NCHW"))
    out = out + bias.reshape(1, 1, 1, 1)
    return jax.nn.sigmoid(out)


if __name__ == "__main__":
    key = jax.random.PRNGKey(0)
    kx, kw, kb, kx2 = jax.random.split(key, 4)

    # Deterministic Conv2d(2, 1, 7) parameter init (kaiming-uniform-like bounds).
    fan_in = 2 * K * K
    bound = 1.0 / (fan_in ** 0.5)
    weight = jax.random.uniform(kw, (1, 2, K, K), jnp.float32, -bound, bound)
    bias = jax.random.uniform(kb, (1,), jnp.float32, -bound, bound)

    # Test 1: small canonical shape, auto c_block -> single channel step.
    B, C, H, W = 2, 4, 16, 16
    x = jax.random.normal(kx, (B, C, H, W), jnp.float32)
    out = jax.block_until_ready(spatial_attention(x, weight, bias))
    ref = reference(x, weight, bias)
    assert out.shape == (B, 1, H, W), out.shape
    err = float(jnp.max(jnp.abs(out - ref)))
    assert err < 5e-5, err

    # Test 2: ragged channel grid (C=20, c_block=8 -> 3 steps, masked tail) and a
    # non-128-multiple flat length L=96; exercises the running max/sum path.
    B2, C2, H2, W2 = 1, 20, 8, 12
    x2 = jax.random.normal(kx2, (B2, C2, H2, W2), jnp.float32)
    out2 = jax.block_until_ready(spatial_attention(x2, weight, bias, c_block=8))
    ref2 = reference(x2, weight, bias)
    assert out2.shape == (B2, 1, H2, W2), out2.shape
    err2 = float(jnp.max(jnp.abs(out2 - ref2)))
    assert err2 < 5e-5, err2

    print("KERNEL_OK")
</pallas_src>

<mosaic_0001>
module attributes {stable_mosaic.version = 11 : i64} {
  func.func @_sa_kernel(%arg0: i32, %arg1: i32, %arg2: memref<2x49xf32, #tpu.memory_space<vmem>>, %arg3: memref<1xf32, #tpu.memory_space<smem>>, %arg4: memref<1x256xi32, #tpu.memory_space<vmem>>, %arg5: memref<1x4x256xf32, #tpu.memory_space<vmem>>, %arg6: memref<1x1x256xf32, #tpu.memory_space<vmem>>, %arg7: memref<2x512xf32, #tpu.memory_space<vmem>>) attributes {dimension_semantics = [#tpu.dimension_semantics<parallel>, #tpu.dimension_semantics<arbitrary>], iteration_bounds = array<i64: 2, 1>, scalar_prefetch = 0 : i64, scratch_operands = 1 : i64, tpu.core_type = #tpu.core_type<tc>, window_params = [{pipeline_mode = #tpu.pipeline_mode<synchronous>, transform_indices = @transform_0, window_bounds = array<i64: 2, 49>}, {transform_indices = @transform_1, window_bounds = array<i64: 1>}, {pipeline_mode = #tpu.pipeline_mode<synchronous>, transform_indices = @transform_2, window_bounds = array<i64: 1, 256>}, {transform_indices = @transform_3, window_bounds = array<i64: 1, 4, 256>}, {transform_indices = @transform_4, window_bounds = array<i64: 1, 1, 256>}]} {
    %c0 = arith.constant 0 : index
    %c0_0 = arith.constant 0 : index
    %c0_1 = arith.constant 0 : index
    %0 = vector.load %arg5[%c0, %c0_0, %c0_1] : memref<1x4x256xf32, #tpu.memory_space<vmem>>, vector<1x4x256xf32>
    %1 = vector.shape_cast %0 : vector<1x4x256xf32> to vector<4x256xf32>
    %cst = arith.constant dense<0xFF800000> : vector<256xf32>
    %2 = vector.multi_reduction <maximumf>, %1, %cst [0] : vector<4x256xf32> to vector<256xf32>
    %3 = vector.shape_cast %2 : vector<256xf32> to vector<1x256xf32>
    %cst_2 = arith.constant dense<0.000000e+00> : vector<256xf32>
    %4 = vector.multi_reduction <add>, %1, %cst_2 [0] : vector<4x256xf32> to vector<256xf32>
    %5 = vector.shape_cast %4 : vector<256xf32> to vector<1x256xf32>
    %c0_i32 = arith.constant 0 : i32
    %6 = arith.cmpi eq, %arg1, %c0_i32 : i32
    %7 = arith.extui %6 : i1 to i32
    %c0_i32_3 = arith.constant 0 : i32
    %8 = arith.cmpi ne, %7, %c0_i32_3 : i32
    scf.if %8 {
      %cst_8 = arith.constant 0.000000e+00 : f32
      %15 = vector.broadcast %cst_8 : f32 to vector<2x128xf32>
      %c0_9 = arith.constant 0 : index
      %c0_10 = arith.constant 0 : index
      %16 = vector.load %arg7[%c0_9, %c0_10] : memref<2x512xf32, #tpu.memory_space<vmem>>, vector<2x128xf32>
      tpu.vector_store %arg7[%c0_9, %c0_10], %15 {strides = array<i32>} : memref<2x512xf32, #tpu.memory_space<vmem>>, vector<2x128xf32>,
      %cst_11 = arith.constant 0.000000e+00 : f32
      %17 = vector.broadcast %cst_11 : f32 to vector<2x128xf32>
      %c0_12 = arith.constant 0 : index
      %c384 = arith.constant 384 : index
      %18 = vector.load %arg7[%c0_12, %c384] : memref<2x512xf32, #tpu.memory_space<vmem>>, vector<2x128xf32>
      tpu.vector_store %arg7[%c0_12, %c384], %17 {strides = array<i32>} : memref<2x512xf32, #tpu.memory_space<vmem>>, vector<2x128xf32>,
      %c0_13 = arith.constant 0 : index
      %c128 = arith.constant 128 : index
      %19 = vector.load %arg7[%c0_13, %c128] : memref<2x512xf32, #tpu.memory_space<vmem>>, vector<1x256xf32>
      tpu.vector_store %arg7[%c0_13, %c128], %3 {strides = array<i32>} : memref<2x512xf32, #tpu.memory_space<vmem>>, vector<1x256xf32>,
      %c1 = arith.constant 1 : index
      %c128_14 = arith.constant 128 : index
      %20 = vector.load %arg7[%c1, %c128_14] : memref<2x512xf32, #tpu.memory_space<vmem>>, vector<1x256xf32>
      tpu.vector_store %arg7[%c1, %c128_14], %5 {strides = array<i32>} : memref<2x512xf32, #tpu.memory_space<vmem>>, vector<1x256xf32>,
    } else {
    }
    %c0_i32_4 = arith.constant 0 : i32
    %9 = arith.cmpi sgt, %arg1, %c0_i32_4 : i32
    %10 = arith.extui %9 : i1 to i32
    %c0_i32_5 = arith.constant 0 : i32
    %11 = arith.cmpi ne, %10, %c0_i32_5 : i32
    scf.if %11 {
      %c0_8 = arith.constant 0 : index
      %c128 = arith.constant 128 : index
      %15 = vector.load %arg7[%c0_8, %c128] : memref<2x512xf32, #tpu.memory_space<vmem>>, vector<1x256xf32>
      %16 = arith.maximumf %15, %3 : vector<1x256xf32>
      %c0_9 = arith.constant 0 : index
      %c128_10 = arith.constant 128 : index
      %17 = vector.load %arg7[%c0_9, %c128_10] : memref<2x512xf32, #tpu.memory_space<vmem>>, vector<1x256xf32>
      tpu.vector_store %arg7[%c0_9, %c128_10], %16 {strides = array<i32>} : memref<2x512xf32, #tpu.memory_space<vmem>>, vector<1x256xf32>,
      %c1 = arith.constant 1 : index
      %c128_11 = arith.constant 128 : index
      %18 = vector.load %arg7[%c1, %c128_11] : memref<2x512xf32, #tpu.memory_space<vmem>>, vector<1x256xf32>
      %19 = arith.addf %18, %5 : vector<1x256xf32>
      %c1_12 = arith.constant 1 : index
      %c128_13 = arith.constant 128 : index
      %20 = vector.load %arg7[%c1_12, %c128_13] : memref<2x512xf32, #tpu.memory_space<vmem>>, vector<1x256xf32>
      tpu.vector_store %arg7[%c1_12, %c128_13], %19 {strides = array<i32>} : memref<2x512xf32, #tpu.memory_space<vmem>>, vector<1x256xf32>,
    } else {
    }
    %c0_i32_6 = arith.constant 0 : i32
    %12 = arith.cmpi eq, %arg1, %c0_i32_6 : i32
    %13 = arith.extui %12 : i1 to i32
    %c0_i32_7 = arith.constant 0 : i32
    %14 = arith.cmpi ne, %13, %c0_i32_7 : i32
    scf.if %14 {
      %c0_8 = arith.constant 0 : index
      %c0_9 = arith.constant 0 : index
      %15 = vector.load %arg4[%c0_8, %c0_9] : memref<1x256xi32, #tpu.memory_space<vmem>>, vector<1x256xi32>
      %c3_i32 = arith.constant 3 : i32
      %16 = vector.broadcast %c3_i32 : i32 to vector<1x256xi32>
      %17 = arith.cmpi sge, %15, %16 : vector<1x256xi32>
      %c2_i32 = arith.constant 2 : i32
      %18 = vector.broadcast %c2_i32 : i32 to vector<1x256xi32>
      %19 = arith.cmpi sge, %15, %18 : vector<1x256xi32>
      %c1_i32 = arith.constant 1 : i32
      %20 = vector.broadcast %c1_i32 : i32 to vector<1x256xi32>
      %21 = arith.cmpi sge, %15, %20 : vector<1x256xi32>
      %c15_i32 = arith.constant 15 : i32
      %22 = vector.broadcast %c15_i32 : i32 to vector<1x256xi32>
      %23 = arith.cmpi slt, %15, %22 : vector<1x256xi32>
      %c14_i32 = arith.constant 14 : i32
      %24 = vector.broadcast %c14_i32 : i32 to vector<1x256xi32>
      %25 = arith.cmpi slt, %15, %24 : vector<1x256xi32>
      %c13_i32 = arith.constant 13 : i32
      %26 = vector.broadcast %c13_i32 : i32 to vector<1x256xi32>
      %27 = arith.cmpi slt, %15, %26 : vector<1x256xi32>
      %cst_10 = arith.constant 0.000000e+00 : f32
      %28 = vector.broadcast %cst_10 : f32 to vector<2x256xf32>
      %c0_11 = arith.constant 0 : index
      %c77 = arith.constant 77 : index
      %29 = vector.load %arg7[%c0_11, %c77] : memref<2x512xf32, #tpu.memory_space<vmem>>, vector<2x256xf32>
      %cst_12 = arith.constant 0.000000e+00 : f32
      %30 = vector.shape_cast %17 : vector<1x256xi1> to vector<1x256xi1>
      %31 = vector.broadcast %30 : vector<1x256xi1> to vector<2x256xi1>
      %32 = vector.broadcast %cst_12 : f32 to vector<2x256xf32>
      %33 = arith.select %31, %29, %32 : vector<2x256xi1>, vector<2x256xf32>
      %c0_13 = arith.constant 0 : index
      %c0_14 = arith.constant 0 : index
      %34 = vector.load %arg2[%c0_13, %c0_14] : memref<2x49xf32, #tpu.memory_space<vmem>>, vector<2x1xf32>
      %35 = vector.broadcast %34 : vector<2x1xf32> to vector<2x256xf32>
      %36 = arith.mulf %35, %33 : vector<2x256xf32>
      %37 = arith.addf %28, %36 : vector<2x256xf32>
      %c0_15 = arith.constant 0 : index
      %c78 = arith.constant 78 : index
      %38 = vector.load %arg7[%c0_15, %c78] : memref<2x512xf32, #tpu.memory_space<vmem>>, vector<2x256xf32>
      %cst_16 = arith.constant 0.000000e+00 : f32
      %39 = vector.shape_cast %19 : vector<1x256xi1> to vector<1x256xi1>
      %40 = vector.broadcast %39 : vector<1x256xi1> to vector<2x256xi1>
      %41 = vector.broadcast %cst_16 : f32 to vector<2x256xf32>
      %42 = arith.select %40, %38, %41 : vector<2x256xi1>, vector<2x256xf32>
      %c0_17 = arith.constant 0 : index
      %c1 = arith.constant 1 : index
      %43 = vector.load %arg2[%c0_17, %c1] : memref<2x49xf32, #tpu.memory_space<vmem>>, vector<2x1xf32>
      %44 = vector.broadcast %43 : vector<2x1xf32> to vector<2x256xf32>
      %45 = arith.mulf %44, %42 : vector<2x256xf32>
      %46 = arith.addf %37, %45 : vector<2x256xf32>
      %c0_18 = arith.constant 0 : index
      %c79 = arith.constant 79 : index
      %47 = vector.load %arg7[%c0_18, %c79] : memref<2x512xf32, #tpu.memory_space<vmem>>, vector<2x256xf32>
      %cst_19 = arith.constant 0.000000e+00 : f32
      %48 = vector.shape_cast %21 : vector<1x256xi1> to vector<1x256xi1>
      %49 = vector.broadcast %48 : vector<1x256xi1> to vector<2x256xi1>
      %50 = vector.broadcast %cst_19 : f32 to vector<2x256xf32>
      %51 = arith.select %49, %47, %50 : vector<2x256xi1>, vector<2x256xf32>
      %c0_20 = arith.constant 0 : index
      %c2 = arith.constant 2 : index
      %52 = vector.load %arg2[%c0_20, %c2] : memref<2x49xf32, #tpu.memory_space<vmem>>, vector<2x1xf32>
      %53 = vector.broadcast %52 : vector<2x1xf32> to vector<2x256xf32>
      %54 = arith.mulf %53, %51 : vector<2x256xf32>
      %55 = arith.addf %46, %54 : vector<2x256xf32>
      %c0_21 = arith.constant 0 : index
      %c80 = arith.constant 80 : index
      %56 = vector.load %arg7[%c0_21, %c80] : memref<2x512xf32, #tpu.memory_space<vmem>>, vector<2x256xf32>
      %c0_22 = arith.constant 0 : index
      %c3 = arith.constant 3 : index
      %57 = vector.load %arg2[%c0_22, %c3] : memref<2x49xf32, #tpu.memory_space<vmem>>, vector<2x1xf32>
      %58 = vector.broadcast %57 : vector<2x1xf32> to vector<2x256xf32>
      %59 = arith.mulf %58, %56 : vector<2x256xf32>
      %60 = arith.addf %55, %59 : vector<2x256xf32>
      %c0_23 = arith.constant 0 : index
      %c81 = arith.constant 81 : index
      %61 = vector.load %arg7[%c0_23, %c81] : memref<2x512xf32, #tpu.memory_space<vmem>>, vector<2x256xf32>
      %cst_24 = arith.constant 0.000000e+00 : f32
      %62 = vector.shape_cast %23 : vector<1x256xi1> to vector<1x256xi1>
      %63 = vector.broadcast %62 : vector<1x256xi1> to vector<2x256xi1>
      %64 = vector.broadcast %cst_24 : f32 to vector<2x256xf32>
      %65 = arith.select %63, %61, %64 : vector<2x256xi1>, vector<2x256xf32>
      %c0_25 = arith.constant 0 : index
      %c4 = arith.constant 4 : index
      %66 = vector.load %arg2[%c0_25, %c4] : memref<2x49xf32, #tpu.memory_space<vmem>>, vector<2x1xf32>
      %67 = vector.broadcast %66 : vector<2x1xf32> to vector<2x256xf32>
      %68 = arith.mulf %67, %65 : vector<2x256xf32>
      %69 = arith.addf %60, %68 : vector<2x256xf32>
      %c0_26 = arith.constant 0 : index
      %c82 = arith.constant 82 : index
      %70 = vector.load %arg7[%c0_26, %c82] : memref<2x512xf32, #tpu.memory_space<vmem>>, vector<2x256xf32>
      %cst_27 = arith.constant 0.000000e+00 : f32
      %71 = vector.shape_cast %25 : vector<1x256xi1> to vector<1x256xi1>
      %72 = vector.broadcast %71 : vector<1x256xi1> to vector<2x256xi1>
      %73 = vector.broadcast %cst_27 : f32 to vector<2x256xf32>
      %74 = arith.select %72, %70, %73 : vector<2x256xi1>, vector<2x256xf32>
      %c0_28 = arith.constant 0 : index
      %c5 = arith.constant 5 : index
      %75 = vector.load %arg2[%c0_28, %c5] : memref<2x49xf32, #tpu.memory_space<vmem>>, vector<2x1xf32>
      %76 = vector.broadcast %75 : vector<2x1xf32> to vector<2x256xf32>
      %77 = arith.mulf %76, %74 : vector<2x256xf32>
      %78 = arith.addf %69, %77 : vector<2x256xf32>
      %c0_29 = arith.constant 0 : index
      %c83 = arith.constant 83 : index
      %79 = vector.load %arg7[%c0_29, %c83] : memref<2x512xf32, #tpu.memory_space<vmem>>, vector<2x256xf32>
      %cst_30 = arith.constant 0.000000e+00 : f32
      %80 = vector.shape_cast %27 : vector<1x256xi1> to vector<1x256xi1>
      %81 = vector.broadcast %80 : vector<1x256xi1> to vector<2x256xi1>
      %82 = vector.broadcast %cst_30 : f32 to vector<2x256xf32>
      %83 = arith.select %81, %79, %82 : vector<2x256xi1>, vector<2x256xf32>
      %c0_31 = arith.constant 0 : index
      %c6 = arith.constant 6 : index
      %84 = vector.load %arg2[%c0_31, %c6] : memref<2x49xf32, #tpu.memory_space<vmem>>, vector<2x1xf32>
      %85 = vector.broadcast %84 : vector<2x1xf32> to vector<2x256xf32>
      %86 = arith.mulf %85, %83 : vector<2x256xf32>
      %87 = arith.addf %78, %86 : vector<2x256xf32>
      %c0_32 = arith.constant 0 : index
      %c93 = arith.constant 93 : index
      %88 = vector.load %arg7[%c0_32, %c93] : memref<2x512xf32, #tpu.memory_space<vmem>>, vector<2x256xf32>
      %cst_33 = arith.constant 0.000000e+00 : f32
      %89 = vector.shape_cast %17 : vector<1x256xi1> to vector<1x256xi1>
      %90 = vector.broadcast %89 : vector<1x256xi1> to vector<2x256xi1>
      %91 = vector.broadcast %cst_33 : f32 to vector<2x256xf32>
      %92 = arith.select %90, %88, %91 : vector<2x256xi1>, vector<2x256xf32>
      %c0_34 = arith.constant 0 : index
      %c7 = arith.constant 7 : index
      %93 = vector.load %arg2[%c0_34, %c7] : memref<2x49xf32, #tpu.memory_space<vmem>>, vector<2x1xf32>
      %94 = vector.broadcast %93 : vector<2x1xf32> to vector<2x256xf32>
      %95 = arith.mulf %94, %92 : vector<2x256xf32>
      %96 = arith.addf %87, %95 : vector<2x256xf32>
      %c0_35 = arith.constant 0 : index
      %c94 = arith.constant 94 : index
      %97 = vector.load %arg7[%c0_35, %c94] : memref<2x512xf32, #tpu.memory_space<vmem>>, vector<2x256xf32>
      %cst_36 = arith.constant 0.000000e+00 : f32
      %98 = vector.shape_cast %19 : vector<1x256xi1> to vector<1x256xi1>
      %99 = vector.broadcast %98 : vector<1x256xi1> to vector<2x256xi1>
      %100 = vector.broadcast %cst_36 : f32 to vector<2x256xf32>
      %101 = arith.select %99, %97, %100 : vector<2x256xi1>, vector<2x256xf32>
      %c0_37 = arith.constant 0 : index
      %c8 = arith.constant 8 : index
      %102 = vector.load %arg2[%c0_37, %c8] : memref<2x49xf32, #tpu.memory_space<vmem>>, vector<2x1xf32>
      %103 = vector.broadcast %102 : vector<2x1xf32> to vector<2x256xf32>
      %104 = arith.mulf %103, %101 : vector<2x256xf32>
      %105 = arith.addf %96, %104 : vector<2x256xf32>
      %c0_38 = arith.constant 0 : index
      %c95 = arith.constant 95 : index
      %106 = vector.load %arg7[%c0_38, %c95] : memref<2x512xf32, #tpu.memory_space<vmem>>, vector<2x256xf32>
      %cst_39 = arith.constant 0.000000e+00 : f32
      %107 = vector.shape_cast %21 : vector<1x256xi1> to vector<1x256xi1>
      %108 = vector.broadcast %107 : vector<1x256xi1> to vector<2x256xi1>
      %109 = vector.broadcast %cst_39 : f32 to vector<2x256xf32>
      %110 = arith.select %108, %106, %109 : vector<2x256xi1>, vector<2x256xf32>
      %c0_40 = arith.constant 0 : index
      %c9 = arith.constant 9 : index
      %111 = vector.load %arg2[%c0_40, %c9] : memref<2x49xf32, #tpu.memory_space<vmem>>, vector<2x1xf32>
      %112 = vector.broadcast %111 : vector<2x1xf32> to vector<2x256xf32>
      %113 = arith.mulf %112, %110 : vector<2x256xf32>
      %114 = arith.addf %105, %113 : vector<2x256xf32>
      %c0_41 = arith.constant 0 : index
      %c96 = arith.constant 96 : index
      %115 = vector.load %arg7[%c0_41, %c96] : memref<2x512xf32, #tpu.memory_space<vmem>>, vector<2x256xf32>
      %c0_42 = arith.constant 0 : index
      %c10 = arith.constant 10 : index
      %116 = vector.load %arg2[%c0_42, %c10] : memref<2x49xf32, #tpu.memory_space<vmem>>, vector<2x1xf32>
      %117 = vector.broadcast %116 : vector<2x1xf32> to vector<2x256xf32>
      %118 = arith.mulf %117, %115 : vector<2x256xf32>
      %119 = arith.addf %114, %118 : vector<2x256xf32>
      %c0_43 = arith.constant 0 : index
      %c97 = arith.constant 97 : index
      %120 = vector.load %arg7[%c0_43, %c97] : memref<2x512xf32, #tpu.memory_space<vmem>>, vector<2x256xf32>
      %cst_44 = arith.constant 0.000000e+00 : f32
      %121 = vector.shape_cast %23 : vector<1x256xi1> to vector<1x256xi1>
      %122 = vector.broadcast %121 : vector<1x256xi1> to vector<2x256xi1>
      %123 = vector.broadcast %cst_44 : f32 to vector<2x256xf32>
      %124 = arith.select %122, %120, %123 : vector<2x256xi1>, vector<2x256xf32>
      %c0_45 = arith.constant 0 : index
      %c11 = arith.constant 11 : index
      %125 = vector.load %arg2[%c0_45, %c11] : memref<2x49xf32, #tpu.memory_space<vmem>>, vector<2x1xf32>
      %126 = vector.broadcast %125 : vector<2x1xf32> to vector<2x256xf32>
      %127 = arith.mulf %126, %124 : vector<2x256xf32>
      %128 = arith.addf %119, %127 : vector<2x256xf32>
      %c0_46 = arith.constant 0 : index
      %c98 = arith.constant 98 : index
      %129 = vector.load %arg7[%c0_46, %c98] : memref<2x512xf32, #tpu.memory_space<vmem>>, vector<2x256xf32>
      %cst_47 = arith.constant 0.000000e+00 : f32
      %130 = vector.shape_cast %25 : vector<1x256xi1> to vector<1x256xi1>
      %131 = vector.broadcast %130 : vector<1x256xi1> to vector<2x256xi1>
      %132 = vector.broadcast %cst_47 : f32 to vector<2x256xf32>
      %133 = arith.select %131, %129, %132 : vector<2x256xi1>, vector<2x256xf32>
      %c0_48 = arith.constant 0 : index
      %c12 = arith.constant 12 : index
      %134 = vector.load %arg2[%c0_48, %c12] : memref<2x49xf32, #tpu.memory_space<vmem>>, vector<2x1xf32>
      %135 = vector.broadcast %134 : vector<2x1xf32> to vector<2x256xf32>
      %136 = arith.mulf %135, %133 : vector<2x256xf32>
      %137 = arith.addf %128, %136 : vector<2x256xf32>
      %c0_49 = arith.constant 0 : index
      %c99 = arith.constant 99 : index
      %138 = vector.load %arg7[%c0_49, %c99] : memref<2x512xf32, #tpu.memory_space<vmem>>, vector<2x256xf32>
      %cst_50 = arith.constant 0.000000e+00 : f32
      %139 = vector.shape_cast %27 : vector<1x256xi1> to vector<1x256xi1>
      %140 = vector.broadcast %139 : vector<1x256xi1> to vector<2x256xi1>
      %141 = vector.broadcast %cst_50 : f32 to vector<2x256xf32>
      %142 = arith.select %140, %138, %141 : vector<2x256xi1>, vector<2x256xf32>
      %c0_51 = arith.constant 0 : index
      %c13 = arith.constant 13 : index
      %143 = vector.load %arg2[%c0_51, %c13] : memref<2x49xf32, #tpu.memory_space<vmem>>, vector<2x1xf32>
      %144 = vector.broadcast %143 : vector<2x1xf32> to vector<2x256xf32>
      %145 = arith.mulf %144, %142 : vector<2x256xf32>
      %146 = arith.addf %137, %145 : vector<2x256xf32>
      %c0_52 = arith.constant 0 : index
      %c109 = arith.constant 109 : index
      %147 = vector.load %arg7[%c0_52, %c109] : memref<2x512xf32, #tpu.memory_space<vmem>>, vector<2x256xf32>
      %cst_53 = arith.constant 0.000000e+00 : f32
      %148 = vector.shape_cast %17 : vector<1x256xi1> to vector<1x256xi1>
      %149 = vector.broadcast %148 : vector<1x256xi1> to vector<2x256xi1>
      %150 = vector.broadcast %cst_53 : f32 to vector<2x256xf32>
      %151 = arith.select %149, %147, %150 : vector<2x256xi1>, vector<2x256xf32>
      %c0_54 = arith.constant 0 : index
      %c14 = arith.constant 14 : index
      %152 = vector.load %arg2[%c0_54, %c14] : memref<2x49xf32, #tpu.memory_space<vmem>>, vector<2x1xf32>
      %153 = vector.broadcast %152 : vector<2x1xf32> to vector<2x256xf32>
      %154 = arith.mulf %153, %151 : vector<2x256xf32>
      %155 = arith.addf %146, %154 : vector<2x256xf32>
      %c0_55 = arith.constant 0 : index
      %c110 = arith.constant 110 : index
      %156 = vector.load %arg7[%c0_55, %c110] : memref<2x512xf32, #tpu.memory_space<vmem>>, vector<2x256xf32>
      %cst_56 = arith.constant 0.000000e+00 : f32
      %157 = vector.shape_cast %19 : vector<1x256xi1> to vector<1x256xi1>
      %158 = vector.broadcast %157 : vector<1x256xi1> to vector<2x256xi1>
      %159 = vector.broadcast %cst_56 : f32 to vector<2x256xf32>
      %160 = arith.select %158, %156, %159 : vector<2x256xi1>, vector<2x256xf32>
      %c0_57 = arith.constant 0 : index
      %c15 = arith.constant 15 : index
      %161 = vector.load %arg2[%c0_57, %c15] : memref<2x49xf32, #tpu.memory_space<vmem>>, vector<2x1xf32>
      %162 = vector.broadcast %161 : vector<2x1xf32> to vector<2x256xf32>
      %163 = arith.mulf %162, %160 : vector<2x256xf32>
      %164 = arith.addf %155, %163 : vector<2x256xf32>
      %c0_58 = arith.constant 0 : index
      %c111 = arith.constant 111 : index
      %165 = vector.load %arg7[%c0_58, %c111] : memref<2x512xf32, #tpu.memory_space<vmem>>, vector<2x256xf32>
      %cst_59 = arith.constant 0.000000e+00 : f32
      %166 = vector.shape_cast %21 : vector<1x256xi1> to vector<1x256xi1>
      %167 = vector.broadcast %166 : vector<1x256xi1> to vector<2x256xi1>
      %168 = vector.broadcast %cst_59 : f32 to vector<2x256xf32>
      %169 = arith.select %167, %165, %168 : vector<2x256xi1>, vector<2x256xf32>
      %c0_60 = arith.constant 0 : index
      %c16 = arith.constant 16 : index
      %170 = vector.load %arg2[%c0_60, %c16] : memref<2x49xf32, #tpu.memory_space<vmem>>, vector<2x1xf32>
      %171 = vector.broadcast %170 : vector<2x1xf32> to vector<2x256xf32>
      %172 = arith.mulf %171, %169 : vector<2x256xf32>
      %173 = arith.addf %164, %172 : vector<2x256xf32>
      %c0_61 = arith.constant 0 : index
      %c112 = arith.constant 112 : index
      %174 = vector.load %arg7[%c0_61, %c112] : memref<2x512xf32, #tpu.memory_space<vmem>>, vector<2x256xf32>
      %c0_62 = arith.constant 0 : index
      %c17 = arith.constant 17 : index
      %175 = vector.load %arg2[%c0_62, %c17] : memref<2x49xf32, #tpu.memory_space<vmem>>, vector<2x1xf32>
      %176 = vector.broadcast %175 : vector<2x1xf32> to vector<2x256xf32>
      %177 = arith.mulf %176, %174 : vector<2x256xf32>
      %178 = arith.addf %173, %177 : vector<2x256xf32>
      %c0_63 = arith.constant 0 : index
      %c113 = arith.constant 113 : index
      %179 = vector.load %arg7[%c0_63, %c113] : memref<2x512xf32, #tpu.memory_space<vmem>>, vector<2x256xf32>
      %cst_64 = arith.constant 0.000000e+00 : f32
      %180 = vector.shape_cast %23 : vector<1x256xi1> to vector<1x256xi1>
      %181 = vector.broadcast %180 : vector<1x256xi1> to vector<2x256xi1>
      %182 = vector.broadcast %cst_64 : f32 to vector<2x256xf32>
      %183 = arith.select %181, %179, %182 : vector<2x256xi1>, vector<2x256xf32>
      %c0_65 = arith.constant 0 : index
      %c18 = arith.constant 18 : index
      %184 = vector.load %arg2[%c0_65, %c18] : memref<2x49xf32, #tpu.memory_space<vmem>>, vector<2x1xf32>
      %185 = vector.broadcast %184 : vector<2x1xf32> to vector<2x256xf32>
      %186 = arith.mulf %185, %183 : vector<2x256xf32>
      %187 = arith.addf %178, %186 : vector<2x256xf32>
      %c0_66 = arith.constant 0 : index
      %c114 = arith.constant 114 : index
      %188 = vector.load %arg7[%c0_66, %c114] : memref<2x512xf32, #tpu.memory_space<vmem>>, vector<2x256xf32>
      %cst_67 = arith.constant 0.000000e+00 : f32
      %189 = vector.shape_cast %25 : vector<1x256xi1> to vector<1x256xi1>
      %190 = vector.broadcast %189 : vector<1x256xi1> to vector<2x256xi1>
      %191 = vector.broadcast %cst_67 : f32 to vector<2x256xf32>
      %192 = arith.select %190, %188, %191 : vector<2x256xi1>, vector<2x256xf32>
      %c0_68 = arith.constant 0 : index
      %c19 = arith.constant 19 : index
      %193 = vector.load %arg2[%c0_68, %c19] : memref<2x49xf32, #tpu.memory_space<vmem>>, vector<2x1xf32>
      %194 = vector.broadcast %193 : vector<2x1xf32> to vector<2x256xf32>
      %195 = arith.mulf %194, %192 : vector<2x256xf32>
      %196 = arith.addf %187, %195 : vector<2x256xf32>
      %c0_69 = arith.constant 0 : index
      %c115 = arith.constant 115 : index
      %197 = vector.load %arg7[%c0_69, %c115] : memref<2x512xf32, #tpu.memory_space<vmem>>, vector<2x256xf32>
      %cst_70 = arith.constant 0.000000e+00 : f32
      %198 = vector.shape_cast %27 : vector<1x256xi1> to vector<1x256xi1>
      %199 = vector.broadcast %198 : vector<1x256xi1> to vector<2x256xi1>
      %200 = vector.broadcast %cst_70 : f32 to vector<2x256xf32>
      %201 = arith.select %199, %197, %200 : vector<2x256xi1>, vector<2x256xf32>
      %c0_71 = arith.constant 0 : index
      %c20 = arith.constant 20 : index
      %202 = vector.load %arg2[%c0_71, %c20] : memref<2x49xf32, #tpu.memory_space<vmem>>, vector<2x1xf32>
      %203 = vector.broadcast %202 : vector<2x1xf32> to vector<2x256xf32>
      %204 = arith.mulf %203, %201 : vector<2x256xf32>
      %205 = arith.addf %196, %204 : vector<2x256xf32>
      %c0_72 = arith.constant 0 : index
      %c125 = arith.constant 125 : index
      %206 = vector.load %arg7[%c0_72, %c125] : memref<2x512xf32, #tpu.memory_space<vmem>>, vector<2x256xf32>
      %cst_73 = arith.constant 0.000000e+00 : f32
      %207 = vector.shape_cast %17 : vector<1x256xi1> to vector<1x256xi1>
      %208 = vector.broadcast %207 : vector<1x256xi1> to vector<2x256xi1>
      %209 = vector.broadcast %cst_73 : f32 to vector<2x256xf32>
      %210 = arith.select %208, %206, %209 : vector<2x256xi1>, vector<2x256xf32>
      %c0_74 = arith.constant 0 : index
      %c21 = arith.constant 21 : index
      %211 = vector.load %arg2[%c0_74, %c21] : memref<2x49xf32, #tpu.memory_space<vmem>>, vector<2x1xf32>
      %212 = vector.broadcast %211 : vector<2x1xf32> to vector<2x256xf32>
      %213 = arith.mulf %212, %210 : vector<2x256xf32>
      %214 = arith.addf %205, %213 : vector<2x256xf32>
      %c0_75 = arith.constant 0 : index
      %c126 = arith.constant 126 : index
      %215 = vector.load %arg7[%c0_75, %c126] : memref<2x512xf32, #tpu.memory_space<vmem>>, vector<2x256xf32>
      %cst_76 = arith.constant 0.000000e+00 : f32
      %216 = vector.shape_cast %19 : vector<1x256xi1> to vector<1x256xi1>
      %217 = vector.broadcast %216 : vector<1x256xi1> to vector<2x256xi1>
      %218 = vector.broadcast %cst_76 : f32 to vector<2x256xf32>
      %219 = arith.select %217, %215, %218 : vector<2x256xi1>, vector<2x256xf32>
      %c0_77 = arith.constant 0 : index
      %c22 = arith.constant 22 : index
      %220 = vector.load %arg2[%c0_77, %c22] : memref<2x49xf32, #tpu.memory_space<vmem>>, vector<2x1xf32>
      %221 = vector.broadcast %220 : vector<2x1xf32> to vector<2x256xf32>
      %222 = arith.mulf %221, %219 : vector<2x256xf32>
      %223 = arith.addf %214, %222 : vector<2x256xf32>
      %c0_78 = arith.constant 0 : index
      %c127 = arith.constant 127 : index
      %224 = vector.load %arg7[%c0_78, %c127] : memref<2x512xf32, #tpu.memory_space<vmem>>, vector<2x256xf32>
      %cst_79 = arith.constant 0.000000e+00 : f32
      %225 = vector.shape_cast %21 : vector<1x256xi1> to vector<1x256xi1>
      %226 = vector.broadcast %225 : vector<1x256xi1> to vector<2x256xi1>
      %227 = vector.broadcast %cst_79 : f32 to vector<2x256xf32>
      %228 = arith.select %226, %224, %227 : vector<2x256xi1>, vector<2x256xf32>
      %c0_80 = arith.constant 0 : index
      %c23 = arith.constant 23 : index
      %229 = vector.load %arg2[%c0_80, %c23] : memref<2x49xf32, #tpu.memory_space<vmem>>, vector<2x1xf32>
      %230 = vector.broadcast %229 : vector<2x1xf32> to vector<2x256xf32>
      %231 = arith.mulf %230, %228 : vector<2x256xf32>
      %232 = arith.addf %223, %231 : vector<2x256xf32>
      %c0_81 = arith.constant 0 : index
      %c128 = arith.constant 128 : index
      %233 = vector.load %arg7[%c0_81, %c128] : memref<2x512xf32, #tpu.memory_space<vmem>>, vector<2x256xf32>
      %c0_82 = arith.constant 0 : index
      %c24 = arith.constant 24 : index
      %234 = vector.load %arg2[%c0_82, %c24] : memref<2x49xf32, #tpu.memory_space<vmem>>, vector<2x1xf32>
      %235 = vector.broadcast %234 : vector<2x1xf32> to vector<2x256xf32>
      %236 = arith.mulf %235, %233 : vector<2x256xf32>
      %237 = arith.addf %232, %236 : vector<2x256xf32>
      %c0_83 = arith.constant 0 : index
      %c129 = arith.constant 129 : index
      %238 = vector.load %arg7[%c0_83, %c129] : memref<2x512xf32, #tpu.memory_space<vmem>>, vector<2x256xf32>
      %cst_84 = arith.constant 0.000000e+00 : f32
      %239 = vector.shape_cast %23 : vector<1x256xi1> to vector<1x256xi1>
      %240 = vector.broadcast %239 : vector<1x256xi1> to vector<2x256xi1>
      %241 = vector.broadcast %cst_84 : f32 to vector<2x256xf32>
      %242 = arith.select %240, %238, %241 : vector<2x256xi1>, vector<2x256xf32>
      %c0_85 = arith.constant 0 : index
      %c25 = arith.constant 25 : index
      %243 = vector.load %arg2[%c0_85, %c25] : memref<2x49xf32, #tpu.memory_space<vmem>>, vector<2x1xf32>
      %244 = vector.broadcast %243 : vector<2x1xf32> to vector<2x256xf32>
      %245 = arith.mulf %244, %242 : vector<2x256xf32>
      %246 = arith.addf %237, %245 : vector<2x256xf32>
      %c0_86 = arith.constant 0 : index
      %c130 = arith.constant 130 : index
      %247 = vector.load %arg7[%c0_86, %c130] : memref<2x512xf32, #tpu.memory_space<vmem>>, vector<2x256xf32>
      %cst_87 = arith.constant 0.000000e+00 : f32
      %248 = vector.shape_cast %25 : vector<1x256xi1> to vector<1x256xi1>
      %249 = vector.broadcast %248 : vector<1x256xi1> to vector<2x256xi1>
      %250 = vector.broadcast %cst_87 : f32 to vector<2x256xf32>
      %251 = arith.select %249, %247, %250 : vector<2x256xi1>, vector<2x256xf32>
      %c0_88 = arith.constant 0 : index
      %c26 = arith.constant 26 : index
      %252 = vector.load %arg2[%c0_88, %c26] : memref<2x49xf32, #tpu.memory_space<vmem>>, vector<2x1xf32>
      %253 = vector.broadcast %252 : vector<2x1xf32> to vector<2x256xf32>
      %254 = arith.mulf %253, %251 : vector<2x256xf32>
      %255 = arith.addf %246, %254 : vector<2x256xf32>
      %c0_89 = arith.constant 0 : index
      %c131 = arith.constant 131 : index
      %256 = vector.load %arg7[%c0_89, %c131] : memref<2x512xf32, #tpu.memory_space<vmem>>, vector<2x256xf32>
      %cst_90 = arith.constant 0.000000e+00 : f32
      %257 = vector.shape_cast %27 : vector<1x256xi1> to vector<1x256xi1>
      %258 = vector.broadcast %257 : vector<1x256xi1> to vector<2x256xi1>
      %259 = vector.broadcast %cst_90 : f32 to vector<2x256xf32>
      %260 = arith.select %258, %256, %259 : vector<2x256xi1>, vector<2x256xf32>
      %c0_91 = arith.constant 0 : index
      %c27 = arith.constant 27 : index
      %261 = vector.load %arg2[%c0_91, %c27] : memref<2x49xf32, #tpu.memory_space<vmem>>, vector<2x1xf32>
      %262 = vector.broadcast %261 : vector<2x1xf32> to vector<2x256xf32>
      %263 = arith.mulf %262, %260 : vector<2x256xf32>
      %264 = arith.addf %255, %263 : vector<2x256xf32>
      %c0_92 = arith.constant 0 : index
      %c141 = arith.constant 141 : index
      %265 = vector.load %arg7[%c0_92, %c141] : memref<2x512xf32, #tpu.memory_space<vmem>>, vector<2x256xf32>
      %cst_93 = arith.constant 0.000000e+00 : f32
      %266 = vector.shape_cast %17 : vector<1x256xi1> to vector<1x256xi1>
      %267 = vector.broadcast %266 : vector<1x256xi1> to vector<2x256xi1>
      %268 = vector.broadcast %cst_93 : f32 to vector<2x256xf32>
      %269 = arith.select %267, %265, %268 : vector<2x256xi1>, vector<2x256xf32>
      %c0_94 = arith.constant 0 : index
      %c28 = arith.constant 28 : index
      %270 = vector.load %arg2[%c0_94, %c28] : memref<2x49xf32, #tpu.memory_space<vmem>>, vector<2x1xf32>
      %271 = vector.broadcast %270 : vector<2x1xf32> to vector<2x256xf32>
      %272 = arith.mulf %271, %269 : vector<2x256xf32>
      %273 = arith.addf %264, %272 : vector<2x256xf32>
      %c0_95 = arith.constant 0 : index
      %c142 = arith.constant 142 : index
      %274 = vector.load %arg7[%c0_95, %c142] : memref<2x512xf32, #tpu.memory_space<vmem>>, vector<2x256xf32>
      %cst_96 = arith.constant 0.000000e+00 : f32
      %275 = vector.shape_cast %19 : vector<1x256xi1> to vector<1x256xi1>
      %276 = vector.broadcast %275 : vector<1x256xi1> to vector<2x256xi1>
      %277 = vector.broadcast %cst_96 : f32 to vector<2x256xf32>
      %278 = arith.select %276, %274, %277 : vector<2x256xi1>, vector<2x256xf32>
      %c0_97 = arith.constant 0 : index
      %c29 = arith.constant 29 : index
      %279 = vector.load %arg2[%c0_97, %c29] : memref<2x49xf32, #tpu.memory_space<vmem>>, vector<2x1xf32>
      %280 = vector.broadcast %279 : vector<2x1xf32> to vector<2x256xf32>
      %281 = arith.mulf %280, %278 : vector<2x256xf32>
      %282 = arith.addf %273, %281 : vector<2x256xf32>
      %c0_98 = arith.constant 0 : index
      %c143 = arith.constant 143 : index
      %283 = vector.load %arg7[%c0_98, %c143] : memref<2x512xf32, #tpu.memory_space<vmem>>, vector<2x256xf32>
      %cst_99 = arith.constant 0.000000e+00 : f32
      %284 = vector.shape_cast %21 : vector<1x256xi1> to vector<1x256xi1>
      %285 = vector.broadcast %284 : vector<1x256xi1> to vector<2x256xi1>
      %286 = vector.broadcast %cst_99 : f32 to vector<2x256xf32>
      %287 = arith.select %285, %283, %286 : vector<2x256xi1>, vector<2x256xf32>
      %c0_100 = arith.constant 0 : index
      %c30 = arith.constant 30 : index
      %288 = vector.load %arg2[%c0_100, %c30] : memref<2x49xf32, #tpu.memory_space<vmem>>, vector<2x1xf32>
      %289 = vector.broadcast %288 : vector<2x1xf32> to vector<2x256xf32>
      %290 = arith.mulf %289, %287 : vector<2x256xf32>
      %291 = arith.addf %282, %290 : vector<2x256xf32>
      %c0_101 = arith.constant 0 : index
      %c144 = arith.constant 144 : index
      %292 = vector.load %arg7[%c0_101, %c144] : memref<2x512xf32, #tpu.memory_space<vmem>>, vector<2x256xf32>
      %c0_102 = arith.constant 0 : index
      %c31 = arith.constant 31 : index
      %293 = vector.load %arg2[%c0_102, %c31] : memref<2x49xf32, #tpu.memory_space<vmem>>, vector<2x1xf32>
      %294 = vector.broadcast %293 : vector<2x1xf32> to vector<2x256xf32>
      %295 = arith.mulf %294, %292 : vector<2x256xf32>
      %296 = arith.addf %291, %295 : vector<2x256xf32>
      %c0_103 = arith.constant 0 : index
      %c145 = arith.constant 145 : index
      %297 = vector.load %arg7[%c0_103, %c145] : memref<2x512xf32, #tpu.memory_space<vmem>>, vector<2x256xf32>
      %cst_104 = arith.constant 0.000000e+00 : f32
      %298 = vector.shape_cast %23 : vector<1x256xi1> to vector<1x256xi1>
      %299 = vector.broadcast %298 : vector<1x256xi1> to vector<2x256xi1>
      %300 = vector.broadcast %cst_104 : f32 to vector<2x256xf32>
      %301 = arith.select %299, %297, %300 : vector<2x256xi1>, vector<2x256xf32>
      %c0_105 = arith.constant 0 : index
      %c32 = arith.constant 32 : index
      %302 = vector.load %arg2[%c0_105, %c32] : memref<2x49xf32, #tpu.memory_space<vmem>>, vector<2x1xf32>
      %303 = vector.broadcast %302 : vector<2x1xf32> to vector<2x256xf32>
      %304 = arith.mulf %303, %301 : vector<2x256xf32>
      %305 = arith.addf %296, %304 : vector<2x256xf32>
      %c0_106 = arith.constant 0 : index
      %c146 = arith.constant 146 : index
      %306 = vector.load %arg7[%c0_106, %c146] : memref<2x512xf32, #tpu.memory_space<vmem>>, vector<2x256xf32>
      %cst_107 = arith.constant 0.000000e+00 : f32
      %307 = vector.shape_cast %25 : vector<1x256xi1> to vector<1x256xi1>
      %308 = vector.broadcast %307 : vector<1x256xi1> to vector<2x256xi1>
      %309 = vector.broadcast %cst_107 : f32 to vector<2x256xf32>
      %310 = arith.select %308, %306, %309 : vector<2x256xi1>, vector<2x256xf32>
      %c0_108 = arith.constant 0 : index
      %c33 = arith.constant 33 : index
      %311 = vector.load %arg2[%c0_108, %c33] : memref<2x49xf32, #tpu.memory_space<vmem>>, vector<2x1xf32>
      %312 = vector.broadcast %311 : vector<2x1xf32> to vector<2x256xf32>
      %313 = arith.mulf %312, %310 : vector<2x256xf32>
      %314 = arith.addf %305, %313 : vector<2x256xf32>
      %c0_109 = arith.constant 0 : index
      %c147 = arith.constant 147 : index
      %315 = vector.load %arg7[%c0_109, %c147] : memref<2x512xf32, #tpu.memory_space<vmem>>, vector<2x256xf32>
      %cst_110 = arith.constant 0.000000e+00 : f32
      %316 = vector.shape_cast %27 : vector<1x256xi1> to vector<1x256xi1>
      %317 = vector.broadcast %316 : vector<1x256xi1> to vector<2x256xi1>
      %318 = vector.broadcast %cst_110 : f32 to vector<2x256xf32>
      %319 = arith.select %317, %315, %318 : vector<2x256xi1>, vector<2x256xf32>
      %c0_111 = arith.constant 0 : index
      %c34 = arith.constant 34 : index
      %320 = vector.load %arg2[%c0_111, %c34] : memref<2x49xf32, #tpu.memory_space<vmem>>, vector<2x1xf32>
      %321 = vector.broadcast %320 : vector<2x1xf32> to vector<2x256xf32>
      %322 = arith.mulf %321, %319 : vector<2x256xf32>
      %323 = arith.addf %314, %322 : vector<2x256xf32>
      %c0_112 = arith.constant 0 : index
      %c157 = arith.constant 157 : index
      %324 = vector.load %arg7[%c0_112, %c157] : memref<2x512xf32, #tpu.memory_space<vmem>>, vector<2x256xf32>
      %cst_113 = arith.constant 0.000000e+00 : f32
      %325 = vector.shape_cast %17 : vector<1x256xi1> to vector<1x256xi1>
      %326 = vector.broadcast %325 : vector<1x256xi1> to vector<2x256xi1>
      %327 = vector.broadcast %cst_113 : f32 to vector<2x256xf32>
      %328 = arith.select %326, %324, %327 : vector<2x256xi1>, vector<2x256xf32>
      %c0_114 = arith.constant 0 : index
      %c35 = arith.constant 35 : index
      %329 = vector.load %arg2[%c0_114, %c35] : memref<2x49xf32, #tpu.memory_space<vmem>>, vector<2x1xf32>
      %330 = vector.broadcast %329 : vector<2x1xf32> to vector<2x256xf32>
      %331 = arith.mulf %330, %328 : vector<2x256xf32>
      %332 = arith.addf %323, %331 : vector<2x256xf32>
      %c0_115 = arith.constant 0 : index
      %c158 = arith.constant 158 : index
      %333 = vector.load %arg7[%c0_115, %c158] : memref<2x512xf32, #tpu.memory_space<vmem>>, vector<2x256xf32>
      %cst_116 = arith.constant 0.000000e+00 : f32
      %334 = vector.shape_cast %19 : vector<1x256xi1> to vector<1x256xi1>
      %335 = vector.broadcast %334 : vector<1x256xi1> to vector<2x256xi1>
      %336 = vector.broadcast %cst_116 : f32 to vector<2x256xf32>
      %337 = arith.select %335, %333, %336 : vector<2x256xi1>, vector<2x256xf32>
      %c0_117 = arith.constant 0 : index
      %c36 = arith.constant 36 : index
      %338 = vector.load %arg2[%c0_117, %c36] : memref<2x49xf32, #tpu.memory_space<vmem>>, vector<2x1xf32>
      %339 = vector.broadcast %338 : vector<2x1xf32> to vector<2x256xf32>
      %340 = arith.mulf %339, %337 : vector<2x256xf32>
      %341 = arith.addf %332, %340 : vector<2x256xf32>
      %c0_118 = arith.constant 0 : index
      %c159 = arith.constant 159 : index
      %342 = vector.load %arg7[%c0_118, %c159] : memref<2x512xf32, #tpu.memory_space<vmem>>, vector<2x256xf32>
      %cst_119 = arith.constant 0.000000e+00 : f32
      %343 = vector.shape_cast %21 : vector<1x256xi1> to vector<1x256xi1>
      %344 = vector.broadcast %343 : vector<1x256xi1> to vector<2x256xi1>
      %345 = vector.broadcast %cst_119 : f32 to vector<2x256xf32>
      %346 = arith.select %344, %342, %345 : vector<2x256xi1>, vector<2x256xf32>
      %c0_120 = arith.constant 0 : index
      %c37 = arith.constant 37 : index
      %347 = vector.load %arg2[%c0_120, %c37] : memref<2x49xf32, #tpu.memory_space<vmem>>, vector<2x1xf32>
      %348 = vector.broadcast %347 : vector<2x1xf32> to vector<2x256xf32>
      %349 = arith.mulf %348, %346 : vector<2x256xf32>
      %350 = arith.addf %341, %349 : vector<2x256xf32>
      %c0_121 = arith.constant 0 : index
      %c160 = arith.constant 160 : index
      %351 = vector.load %arg7[%c0_121, %c160] : memref<2x512xf32, #tpu.memory_space<vmem>>, vector<2x256xf32>
      %c0_122 = arith.constant 0 : index
      %c38 = arith.constant 38 : index
      %352 = vector.load %arg2[%c0_122, %c38] : memref<2x49xf32, #tpu.memory_space<vmem>>, vector<2x1xf32>
      %353 = vector.broadcast %352 : vector<2x1xf32> to vector<2x256xf32>
      %354 = arith.mulf %353, %351 : vector<2x256xf32>
      %355 = arith.addf %350, %354 : vector<2x256xf32>
      %c0_123 = arith.constant 0 : index
      %c161 = arith.constant 161 : index
      %356 = vector.load %arg7[%c0_123, %c161] : memref<2x512xf32, #tpu.memory_space<vmem>>, vector<2x256xf32>
      %cst_124 = arith.constant 0.000000e+00 : f32
      %357 = vector.shape_cast %23 : vector<1x256xi1> to vector<1x256xi1>
      %358 = vector.broadcast %357 : vector<1x256xi1> to vector<2x256xi1>
      %359 = vector.broadcast %cst_124 : f32 to vector<2x256xf32>
      %360 = arith.select %358, %356, %359 : vector<2x256xi1>, vector<2x256xf32>
      %c0_125 = arith.constant 0 : index
      %c39 = arith.constant 39 : index
      %361 = vector.load %arg2[%c0_125, %c39] : memref<2x49xf32, #tpu.memory_space<vmem>>, vector<2x1xf32>
      %362 = vector.broadcast %361 : vector<2x1xf32> to vector<2x256xf32>
      %363 = arith.mulf %362, %360 : vector<2x256xf32>
      %364 = arith.addf %355, %363 : vector<2x256xf32>
      %c0_126 = arith.constant 0 : index
      %c162 = arith.constant 162 : index
      %365 = vector.load %arg7[%c0_126, %c162] : memref<2x512xf32, #tpu.memory_space<vmem>>, vector<2x256xf32>
      %cst_127 = arith.constant 0.000000e+00 : f32
      %366 = vector.shape_cast %25 : vector<1x256xi1> to vector<1x256xi1>
      %367 = vector.broadcast %366 : vector<1x256xi1> to vector<2x256xi1>
      %368 = vector.broadcast %cst_127 : f32 to vector<2x256xf32>
      %369 = arith.select %367, %365, %368 : vector<2x256xi1>, vector<2x256xf32>
      %c0_128 = arith.constant 0 : index
      %c40 = arith.constant 40 : index
      %370 = vector.load %arg2[%c0_128, %c40] : memref<2x49xf32, #tpu.memory_space<vmem>>, vector<2x1xf32>
      %371 = vector.broadcast %370 : vector<2x1xf32> to vector<2x256xf32>
      %372 = arith.mulf %371, %369 : vector<2x256xf32>
      %373 = arith.addf %364, %372 : vector<2x256xf32>
      %c0_129 = arith.constant 0 : index
      %c163 = arith.constant 163 : index
      %374 = vector.load %arg7[%c0_129, %c163] : memref<2x512xf32, #tpu.memory_space<vmem>>, vector<2x256xf32>
      %cst_130 = arith.constant 0.000000e+00 : f32
      %375 = vector.shape_cast %27 : vector<1x256xi1> to vector<1x256xi1>
      %376 = vector.broadcast %375 : vector<1x256xi1> to vector<2x256xi1>
      %377 = vector.broadcast %cst_130 : f32 to vector<2x256xf32>
      %378 = arith.select %376, %374, %377 : vector<2x256xi1>, vector<2x256xf32>
      %c0_131 = arith.constant 0 : index
      %c41 = arith.constant 41 : index
      %379 = vector.load %arg2[%c0_131, %c41] : memref<2x49xf32, #tpu.memory_space<vmem>>, vector<2x1xf32>
      %380 = vector.broadcast %379 : vector<2x1xf32> to vector<2x256xf32>
      %381 = arith.mulf %380, %378 : vector<2x256xf32>
      %382 = arith.addf %373, %381 : vector<2x256xf32>
      %c0_132 = arith.constant 0 : index
      %c173 = arith.constant 173 : index
      %383 = vector.load %arg7[%c0_132, %c173] : memref<2x512xf32, #tpu.memory_space<vmem>>, vector<2x256xf32>
      %cst_133 = arith.constant 0.000000e+00 : f32
      %384 = vector.shape_cast %17 : vector<1x256xi1> to vector<1x256xi1>
      %385 = vector.broadcast %384 : vector<1x256xi1> to vector<2x256xi1>
      %386 = vector.broadcast %cst_133 : f32 to vector<2x256xf32>
      %387 = arith.select %385, %383, %386 : vector<2x256xi1>, vector<2x256xf32>
      %c0_134 = arith.constant 0 : index
      %c42 = arith.constant 42 : index
      %388 = vector.load %arg2[%c0_134, %c42] : memref<2x49xf32, #tpu.memory_space<vmem>>, vector<2x1xf32>
      %389 = vector.broadcast %388 : vector<2x1xf32> to vector<2x256xf32>
      %390 = arith.mulf %389, %387 : vector<2x256xf32>
      %391 = arith.addf %382, %390 : vector<2x256xf32>
      %c0_135 = arith.constant 0 : index
      %c174 = arith.constant 174 : index
      %392 = vector.load %arg7[%c0_135, %c174] : memref<2x512xf32, #tpu.memory_space<vmem>>, vector<2x256xf32>
      %cst_136 = arith.constant 0.000000e+00 : f32
      %393 = vector.shape_cast %19 : vector<1x256xi1> to vector<1x256xi1>
      %394 = vector.broadcast %393 : vector<1x256xi1> to vector<2x256xi1>
      %395 = vector.broadcast %cst_136 : f32 to vector<2x256xf32>
      %396 = arith.select %394, %392, %395 : vector<2x256xi1>, vector<2x256xf32>
      %c0_137 = arith.constant 0 : index
      %c43 = arith.constant 43 : index
      %397 = vector.load %arg2[%c0_137, %c43] : memref<2x49xf32, #tpu.memory_space<vmem>>, vector<2x1xf32>
      %398 = vector.broadcast %397 : vector<2x1xf32> to vector<2x256xf32>
      %399 = arith.mulf %398, %396 : vector<2x256xf32>
      %400 = arith.addf %391, %399 : vector<2x256xf32>
      %c0_138 = arith.constant 0 : index
      %c175 = arith.constant 175 : index
      %401 = vector.load %arg7[%c0_138, %c175] : memref<2x512xf32, #tpu.memory_space<vmem>>, vector<2x256xf32>
      %cst_139 = arith.constant 0.000000e+00 : f32
      %402 = vector.shape_cast %21 : vector<1x256xi1> to vector<1x256xi1>
      %403 = vector.broadcast %402 : vector<1x256xi1> to vector<2x256xi1>
      %404 = vector.broadcast %cst_139 : f32 to vector<2x256xf32>
      %405 = arith.select %403, %401, %404 : vector<2x256xi1>, vector<2x256xf32>
      %c0_140 = arith.constant 0 : index
      %c44 = arith.constant 44 : index
      %406 = vector.load %arg2[%c0_140, %c44] : memref<2x49xf32, #tpu.memory_space<vmem>>, vector<2x1xf32>
      %407 = vector.broadcast %406 : vector<2x1xf32> to vector<2x256xf32>
      %408 = arith.mulf %407, %405 : vector<2x256xf32>
      %409 = arith.addf %400, %408 : vector<2x256xf32>
      %c0_141 = arith.constant 0 : index
      %c176 = arith.constant 176 : index
      %410 = vector.load %arg7[%c0_141, %c176] : memref<2x512xf32, #tpu.memory_space<vmem>>, vector<2x256xf32>
      %c0_142 = arith.constant 0 : index
      %c45 = arith.constant 45 : index
      %411 = vector.load %arg2[%c0_142, %c45] : memref<2x49xf32, #tpu.memory_space<vmem>>, vector<2x1xf32>
      %412 = vector.broadcast %411 : vector<2x1xf32> to vector<2x256xf32>
      %413 = arith.mulf %412, %410 : vector<2x256xf32>
      %414 = arith.addf %409, %413 : vector<2x256xf32>
      %c0_143 = arith.constant 0 : index
      %c177 = arith.constant 177 : index
      %415 = vector.load %arg7[%c0_143, %c177] : memref<2x512xf32, #tpu.memory_space<vmem>>, vector<2x256xf32>
      %cst_144 = arith.constant 0.000000e+00 : f32
      %416 = vector.shape_cast %23 : vector<1x256xi1> to vector<1x256xi1>
      %417 = vector.broadcast %416 : vector<1x256xi1> to vector<2x256xi1>
      %418 = vector.broadcast %cst_144 : f32 to vector<2x256xf32>
      %419 = arith.select %417, %415, %418 : vector<2x256xi1>, vector<2x256xf32>
      %c0_145 = arith.constant 0 : index
      %c46 = arith.constant 46 : index
      %420 = vector.load %arg2[%c0_145, %c46] : memref<2x49xf32, #tpu.memory_space<vmem>>, vector<2x1xf32>
      %421 = vector.broadcast %420 : vector<2x1xf32> to vector<2x256xf32>
      %422 = arith.mulf %421, %419 : vector<2x256xf32>
      %423 = arith.addf %414, %422 : vector<2x256xf32>
      %c0_146 = arith.constant 0 : index
      %c178 = arith.constant 178 : index
      %424 = vector.load %arg7[%c0_146, %c178] : memref<2x512xf32, #tpu.memory_space<vmem>>, vector<2x256xf32>
      %cst_147 = arith.constant 0.000000e+00 : f32
      %425 = vector.shape_cast %25 : vector<1x256xi1> to vector<1x256xi1>
      %426 = vector.broadcast %425 : vector<1x256xi1> to vector<2x256xi1>
      %427 = vector.broadcast %cst_147 : f32 to vector<2x256xf32>
      %428 = arith.select %426, %424, %427 : vector<2x256xi1>, vector<2x256xf32>
      %c0_148 = arith.constant 0 : index
      %c47 = arith.constant 47 : index
      %429 = vector.load %arg2[%c0_148, %c47] : memref<2x49xf32, #tpu.memory_space<vmem>>, vector<2x1xf32>
      %430 = vector.broadcast %429 : vector<2x1xf32> to vector<2x256xf32>
      %431 = arith.mulf %430, %428 : vector<2x256xf32>
      %432 = arith.addf %423, %431 : vector<2x256xf32>
      %c0_149 = arith.constant 0 : index
      %c179 = arith.constant 179 : index
      %433 = vector.load %arg7[%c0_149, %c179] : memref<2x512xf32, #tpu.memory_space<vmem>>, vector<2x256xf32>
      %cst_150 = arith.constant 0.000000e+00 : f32
      %434 = vector.shape_cast %27 : vector<1x256xi1> to vector<1x256xi1>
      %435 = vector.broadcast %434 : vector<1x256xi1> to vector<2x256xi1>
      %436 = vector.broadcast %cst_150 : f32 to vector<2x256xf32>
      %437 = arith.select %435, %433, %436 : vector<2x256xi1>, vector<2x256xf32>
      %c0_151 = arith.constant 0 : index
      %c48 = arith.constant 48 : index
      %438 = vector.load %arg2[%c0_151, %c48] : memref<2x49xf32, #tpu.memory_space<vmem>>, vector<2x1xf32>
      %439 = vector.broadcast %438 : vector<2x1xf32> to vector<2x256xf32>
      %440 = arith.mulf %439, %437 : vector<2x256xf32>
      %441 = arith.addf %432, %440 : vector<2x256xf32>
      %cst_152 = arith.constant dense<0.000000e+00> : vector<256xf32>
      %442 = vector.multi_reduction <add>, %441, %cst_152 [0] : vector<2x256xf32> to vector<256xf32>
      %443 = vector.shape_cast %442 : vector<256xf32> to vector<1x256xf32>
      %c0_153 = arith.constant 0 : index
      %444 = memref.load %arg3[%c0_153] : memref<1xf32, #tpu.memory_space<smem>>
      %445 = vector.broadcast %444 : f32 to vector<1x256xf32>
      %446 = arith.addf %443, %445 : vector<1x256xf32>
      %447 = arith.negf %446 : vector<1x256xf32>
      %448 = math.exp %447 : vector<1x256xf32>
      %cst_154 = arith.constant 1.000000e+00 : f32
      %449 = vector.broadcast %cst_154 : f32 to vector<1x256xf32>
      %450 = arith.addf %449, %448 : vector<1x256xf32>
      %451 = arith.divf %449, %450 : vector<1x256xf32>
      %c0_155 = arith.constant 0 : index
      %c0_156 = arith.constant 0 : index
      %c0_157 = arith.constant 0 : index
      %452 = vector.load %arg6[%c0_155, %c0_156, %c0_157] : memref<1x1x256xf32, #tpu.memory_space<vmem>>, vector<1x1x256xf32>
      %453 = vector.shape_cast %452 : vector<1x1x256xf32> to vector<1x256xf32>
      %454 = vector.shape_cast %451 : vector<1x256xf32> to vector<1x1x256xf32>
      tpu.vector_store %arg6[%c0_155, %c0_156, %c0_157], %454 {strides = array<i32>} : memref<1x1x256xf32, #tpu.memory_space<vmem>>, vector<1x1x256xf32>,
    } else {
    }
    return
  }
  func.func @transform_0(%arg0: i32, %arg1: i32) -> (i32, i32) {
    %c0_i32 = arith.constant 0 : i32
    %c0_i32_0 = arith.constant 0 : i32
    %c0_i32_1 = arith.constant 0 : i32
    return %c0_i32, %c0_i32_0 : i32, i32
  }
  func.func @transform_1(%arg0: i32, %arg1: i32) -> i32 {
    %c0_i32 = arith.constant 0 : i32
    %c0_i32_0 = arith.constant 0 : i32
    return %c0_i32 : i32
  }
  func.func @transform_2(%arg0: i32, %arg1: i32) -> (i32, i32) {
    %c0_i32 = arith.constant 0 : i32
    %c0_i32_0 = arith.constant 0 : i32
    %c0_i32_1 = arith.constant 0 : i32
    return %c0_i32, %c0_i32_0 : i32, i32
  }
  func.func @transform_3(%arg0: i32, %arg1: i32) -> (i32, i32, i32) {
    %c0_i32 = arith.constant 0 : i32
    %c0_i32_0 = arith.constant 0 : i32
    return %arg0, %arg1, %c0_i32 : i32, i32, i32
  }
  func.func @transform_4(%arg0: i32, %arg1: i32) -> (i32, i32, i32) {
    %c0_i32 = arith.constant 0 : i32
    %c0_i32_0 = arith.constant 0 : i32
    %c0_i32_1 = arith.constant 0 : i32
    return %arg0, %c0_i32, %c0_i32_0 : i32, i32, i32
  }
}

</mosaic_0001>

<llo_original>
// kernel: tpu_custom_call.1
$region0: #{tpu_custom_call.1}
  #allocation0 [shape = 'u32[]', space=smem, size = 0x4, offset = 0x4, fixed_abs, tag = 'smem constant byte address 0x4 - core index']
  #allocation1 [shape = 'u32[144,128]{1,0:T(1,128)}', space=vmem, size = 0x12000, scoped, tag = 'internal scratch']
  #allocation2 [shape = 'f32[2,512]{1,0:T(2,128)}', space=vmem, size = 0x1000, scoped, tag = 'scratch operand']
  #allocation3 [shape = 'f32[1]{0:T(128)S(6)}', space=smem, size = 0x200, scoped, tag = 'scoped memory for tpu_custom_call.1']
  %s0 = inlined_call_operand.vmem [shape: f32[2,49], index: 0, kind: input, shape index: {}]
  %s1 = inlined_call_operand.<no memory space> [shape: f32[1], index: 1, kind: input, shape index: {}]
  %s2 = inlined_call_operand.hbm [shape: s32[1,256], index: 2, kind: input, shape index: {}]
  %s3 = inlined_call_operand.hbm [shape: f32[2,4,256], index: 3, kind: input, shape index: {}]
  %s4 = inlined_call_operand.hbm [shape: f32[2,1,256], index: 4, kind: output, shape index: {}]
  %s5 = sld [smem:[#allocation0]]
  $region69: #{tpu_custom_call.1} parent=0
    _
  %s7 = ssub.s32 1, %s5
  %s8 = scalar_select 0, %s7, %s5
  %9 = sst [smem:[#allocation3]] %s1
  $region1: #{tpu_custom_call.1} parent=0
    #allocation4 [shape = 'u8[1024]{0}', space=vmem, size = 0x400, scoped, tag = 'input window, operand 2, single buffered']
    #allocation5 [shape = 's32[2]{0}', space=sflag, size = 0x8, scoped, tag = 'scoped memory for tpu_custom_call.1']
    #allocation6 [shape = 's32[2]{0}', space=sflag, size = 0x8, scoped, tag = 'scoped memory for tpu_custom_call.1']
    #allocation7 [shape = 'u8[8192]{0}', space=vmem, size = 0x2000, scoped, tag = 'input window, operand 3']
    #allocation8 [shape = 's32[2]{0}', space=sflag, size = 0x8, scoped, tag = 'scoped memory for tpu_custom_call.1']
    #allocation9 [shape = 'u8[2048]{0}', space=vmem, size = 0x800, scoped, tag = 'output window, operand 0']
    %10 = vsyncpa [#allocation5], 0
    %11 = vsyncpa [#allocation8], 0
    %s12 = scalar_lea.sflag [#allocation8], 1
    %13 = vsyncpa %s12, 0
    %14 = vsyncpa [#allocation6], 0
    %s15 = scalar_lea.sflag [#allocation6], 1
    %16 = vsyncpa %s15, 0
    loop: start=0, step=1, limit=4
    $region2: #{tpu_custom_call.1} parent=1 // loop_pre_header
      _
    $region3: #{tpu_custom_call.1} parent=1 // loop_header
      %s18 = sphi 0, %s22
      %p19 = scmp.ge.s32.totalorder %s18, 4
      %s25 = sphi 0, %s37
      %s26 = sphi 0, %s33
      %s27 = sphi 0, %s25
      %s28 = sphi 0, %s26
      %s29 = sphi 0, %s27
      %s30 = sphi 0, %s28
      %s38 = sphi 0, %s38
      %s40 = sphi 0, %s38
      %s41 = sphi 0, %s40
      %s55 = sphi 0, %s41
      %s59 = sphi 0, %s59
      %s61 = sphi 0, %s59
      %s62 = sphi 0, %s61
      %s76 = sphi 0, %s62
      %s80 = sphi 0, %s80
      %s82 = sphi 0, %s80
      %s83 = sphi 0, %s82
      %s97 = sphi 0, %s83
      %s105 = sphi 0, %s107
      %s108 = sphi 0, %s105
      %s109 = sphi 0, %s108
      %s125 = sphi 0, %s109
      %s131 = sphi 0, %s133
      %s134 = sphi 0, %s131
      %s135 = sphi 0, %s134
      %s151 = sphi 0, %s135
    $region4: #{tpu_custom_call.1} parent=1 // loop_header_branch
      %21 = sbr.rel (%p19) target = $region8
    $region5: #{tpu_custom_call.1} parent=1 // loop_body
      %s23 = ssub.s32 %s18, 1
      %s24 = ssub.s32 %s18, 2
      %s31 = sadd.s32 1, %s26
      %p32 = scmp.ge.s32.totalorder %s31, 1
      %s33 = scalar_select %p32, 0, %s31
      %s34 = sadd.s32 1, %s25
      %s35 = scalar_select %p32, %s34, %s25
      %p36 = scmp.ge.s32.totalorder %s35, 2
      %s37 = scalar_select %p36, 0, %s35
      %s39 = sadd.s32 %s38, 1
      %p42 = scmp.eq.s32.totalorder %s18, 1
      %p43 = scmp.ne.s32.totalorder %s38, %s40
      %p44 = scmp.eq.s32.totalorder %s18, 0
      %p45 = por %p43, %p44
      %p46 = scmp.ne.s32.totalorder %s38, %s40
      %p47 = scmp.eq.s32.totalorder %s23, 1
      %p48 = por %p46, %p47
      %p49 = scmp.ne.s32.totalorder %s40, %s41
      %p50 = scmp.eq.s32.totalorder %s23, 0
      %p51 = por %p49, %p50
      %p52 = scmp.ne.s32.totalorder %s40, %s41
      %p53 = scmp.eq.s32.totalorder %s24, 1
      %p54 = por %p52, %p53
      %p56 = scmp.ne.s32.totalorder %s41, %s55
      %p57 = scmp.eq.s32.totalorder %s24, 0
      %p58 = por %p56, %p57
      %s60 = sadd.s32 %s59, 1
      %p63 = scmp.eq.s32.totalorder %s18, 1
      %p64 = scmp.ne.s32.totalorder %s59, %s61
      %p65 = scmp.eq.s32.totalorder %s18, 0
      %p66 = por %p64, %p65
      %p67 = scmp.ne.s32.totalorder %s59, %s61
      %p68 = scmp.eq.s32.totalorder %s23, 1
      %p69 = por %p67, %p68
      %p70 = scmp.ne.s32.totalorder %s61, %s62
      %p71 = scmp.eq.s32.totalorder %s23, 0
      %p72 = por %p70, %p71
      %p73 = scmp.ne.s32.totalorder %s61, %s62
      %p74 = scmp.eq.s32.totalorder %s24, 1
      %p75 = por %p73, %p74
      %p77 = scmp.ne.s32.totalorder %s62, %s76
      %p78 = scmp.eq.s32.totalorder %s24, 0
      %p79 = por %p77, %p78
      %s81 = sadd.s32 %s80, 1
      %p84 = scmp.eq.s32.totalorder %s18, 1
      %p85 = scmp.ne.s32.totalorder %s80, %s82
      %p86 = scmp.eq.s32.totalorder %s18, 0
      %p87 = por %p85, %p86
      %p88 = scmp.ne.s32.totalorder %s80, %s82
      %p89 = scmp.eq.s32.totalorder %s23, 1
      %p90 = por %p88, %p89
      %p91 = scmp.ne.s32.totalorder %s82, %s83
      %p92 = scmp.eq.s32.totalorder %s23, 0
      %p93 = por %p91, %p92
      %p94 = scmp.ne.s32.totalorder %s82, %s83
      %p95 = scmp.eq.s32.totalorder %s24, 1
      %p96 = por %p94, %p95
      %p98 = scmp.ne.s32.totalorder %s83, %s97
      %p99 = scmp.eq.s32.totalorder %s24, 0
      %p100 = por %p98, %p99
      %s101 = ssub.s32 %s25, %s37
      %s102 = ssub.s32 %s26, %s33
      %s103 = sor.u32 %s101, %s102
      %p104 = scmp.eq.s32.totalorder %s103, 0
      %s106 = sadd.s32 %s105, 1
      %s107 = scalar_select %p104, %s105, %s106
      %p110 = pneg %p104
      %p111 = scmp.eq.s32.totalorder %s18, 1
      %p112 = por %p110, %p111
      %p113 = scmp.ne.s32.totalorder %s105, %s108
      %p114 = scmp.eq.s32.totalorder %s18, 0
      %p115 = por %p113, %p114
      %p116 = scmp.ne.s32.totalorder %s105, %s108
      %p117 = scmp.eq.s32.totalorder %s23, 1
      %p118 = por %p116, %p117
      %p119 = scmp.ne.s32.totalorder %s108, %s109
      %p120 = scmp.eq.s32.totalorder %s23, 0
      %p121 = por %p119, %p120
      %p122 = scmp.ne.s32.totalorder %s108, %s109
      %p123 = scmp.eq.s32.totalorder %s24, 1
      %p124 = por %p122, %p123
      %p126 = scmp.ne.s32.totalorder %s109, %s125
      %p127 = scmp.eq.s32.totalorder %s24, 0
      %p128 = por %p126, %p127
      %s129 = ssub.s32 %s25, %s37
      %p130 = scmp.eq.s32.totalorder %s129, 0
      %s132 = sadd.s32 %s131, 1
      %s133 = scalar_select %p130, %s131, %s132
      %p136 = pneg %p130
      %p137 = scmp.eq.s32.totalorder %s18, 1
      %p138 = por %p136, %p137
      %p139 = scmp.ne.s32.totalorder %s131, %s134
      %p140 = scmp.eq.s32.totalorder %s18, 0
      %p141 = por %p139, %p140
      %p142 = scmp.ne.s32.totalorder %s131, %s134
      %p143 = scmp.eq.s32.totalorder %s23, 1
      %p144 = por %p142, %p143
      %p145 = scmp.ne.s32.totalorder %s134, %s135
      %p146 = scmp.eq.s32.totalorder %s23, 0
      %p147 = por %p145, %p146
      %p148 = scmp.ne.s32.totalorder %s134, %s135
      %p149 = scmp.eq.s32.totalorder %s24, 1
      %p150 = por %p148, %p149
      %p152 = scmp.ne.s32.totalorder %s135, %s151
      %p153 = scmp.eq.s32.totalorder %s24, 0
      %p154 = por %p152, %p153
      %p155 = scmp.le.s32.totalorder 1, %s18
      %p156 = scmp.lt.s32.totalorder %s18, 3
      %p157 = pnand %p155, %p156
      %p158 = pneg %p157
      // Predicated region
      $region9: #{tpu_custom_call.1} parent=5 // pred_check
        _
      $region10: #{tpu_custom_call.1} parent=5 // pred_check_branch
        %160 = sbr.rel (%p157) target = $region12
      $region11: #{tpu_custom_call.1} parent=5 // pred_region
        %s161 = ssub.s32 %s18, 1
        // Predicated region
        $region13: #{tpu_custom_call.1} parent=11 // pred_check
          %p162 = pneg %p51
        $region14: #{tpu_custom_call.1} parent=11 // pred_check_branch
          %164 = sbr.rel (%p162) target = $region16
        $region15: #{tpu_custom_call.1} parent=11 // pred_region
          _
        $region16: #{tpu_custom_call.1} parent=11 // pred_fallthru
          _
        // Predicated region
        $region17: #{tpu_custom_call.1} parent=11 // pred_check
          %p165 = pneg %p72
        $region18: #{tpu_custom_call.1} parent=11 // pred_check_branch
          %167 = sbr.rel (%p165) target = $region20
        $region19: #{tpu_custom_call.1} parent=11 // pred_region
          _
        $region20: #{tpu_custom_call.1} parent=11 // pred_fallthru
          _
        // Predicated region
        $region21: #{tpu_custom_call.1} parent=11 // pred_check
          %p168 = pneg %p93
        $region22: #{tpu_custom_call.1} parent=11 // pred_check_branch
          %170 = sbr.rel (%p168) target = $region24
        $region23: #{tpu_custom_call.1} parent=11 // pred_region
          %s172 = ssub.s32 32, 32
          %173 = vsyncadd [#allocation5], %s172
          %s175 = sshll.u32 [#allocation4], 4
          %s176 = int_to_ptr.vmem [resolvable:$true] %s175
          %178 = dma.hbm_to_vmem [thread:$0]  %s2, 32, %s176, [#allocation5]
        $region24: #{tpu_custom_call.1} parent=11 // pred_fallthru
          _
      $region12: #{tpu_custom_call.1} parent=5 // pred_fallthru
        _
      %p179 = scmp.lt.s32.totalorder %s18, 2
      // Predicated region
      $region25: #{tpu_custom_call.1} parent=5 // pred_check
        %p180 = pneg %p179
      $region26: #{tpu_custom_call.1} parent=5 // pred_check_branch
        %182 = sbr.rel (%p180) target = $region28
      $region27: #{tpu_custom_call.1} parent=5 // pred_region
        // Predicated region
        $region29: #{tpu_custom_call.1} parent=27 // pred_check
          %p183 = pneg %p115
        $region30: #{tpu_custom_call.1} parent=27 // pred_check_branch
          %185 = sbr.rel (%p183) target = $region32
        $region31: #{tpu_custom_call.1} parent=27 // pred_region
          %s186 = sand.u32 %s105, 1
          %s187 = scalar_lea.sflag [#allocation8], %s186
          %s188 = sand.u32 %s105, 1
          %s189 = smul.addr %s188, 8
          %s190 = scalar_lea.vmem [#allocation7], %s189
          %s192 = ssub.s32 128, 128
          %193 = vsyncadd %s187, %s192
          %s194 = smul.addr %s26, 2
          %s195 = smul.addr %s25, 2
          %s196 = sadd.s32 %s194, %s195
          %s197 = smul.addr %s196, 64
          %s198 = scalar_lea.hbm %s3, %s197
          %s200 = sshll.u32 %s190, 4
          %s201 = int_to_ptr.vmem [resolvable:$true] %s200
          %203 = dma.hbm_to_vmem [thread:$0]  %s198, 128, %s201, %s187
        $region32: #{tpu_custom_call.1} parent=27 // pred_fallthru
          _
      $region28: #{tpu_custom_call.1} parent=5 // pred_fallthru
        _
      %p204 = scmp.le.s32.totalorder 1, %s18
      %p205 = scmp.lt.s32.totalorder %s18, 3
      %p206 = pnand %p204, %p205
      %p207 = pneg %p206
      // Predicated region
      $region33: #{tpu_custom_call.1} parent=5 // pred_check
        _
      $region34: #{tpu_custom_call.1} parent=5 // pred_check_branch
        %209 = sbr.rel (%p206) target = $region36
      $region35: #{tpu_custom_call.1} parent=5 // pred_region
        %s210 = ssub.s32 %s18, 1
        // Predicated region
        $region37: #{tpu_custom_call.1} parent=35 // pred_check
          %p211 = pneg %p93
        $region38: #{tpu_custom_call.1} parent=35 // pred_check_branch
          %213 = sbr.rel (%p211) target = $region40
        $region39: #{tpu_custom_call.1} parent=35 // pred_region
          %214 = dma.done [#allocation5], 32
        $region40: #{tpu_custom_call.1} parent=35 // pred_fallthru
          _
        %s215 = sand.u32 %s108, 1
        %s216 = scalar_lea.sflag [#allocation8], %s215
        %s217 = sand.u32 %s108, 1
        %s218 = smul.addr %s217, 8
        %s219 = scalar_lea.vmem [#allocation7], %s218
        // Predicated region
        $region41: #{tpu_custom_call.1} parent=35 // pred_check
          %p220 = pneg %p121
        $region42: #{tpu_custom_call.1} parent=35 // pred_check_branch
          %222 = sbr.rel (%p220) target = $region44
        $region43: #{tpu_custom_call.1} parent=35 // pred_region
          %223 = dma.done %s216, 128
        $region44: #{tpu_custom_call.1} parent=35 // pred_fallthru
          _
        %p224 = pneg %p51
        %p225 = pneg %p48
        %p226 = pneg %p72
        %p227 = pneg %p69
        %p228 = pneg %p93
        %p229 = pneg %p90
        %s230 = sand.u32 %s108, 1
        %s231 = scalar_lea.sflag [#allocation8], %s230
        %s232 = sand.u32 %s108, 1
        %s233 = smul.addr %s232, 8
        %s234 = scalar_lea.vmem [#allocation7], %s233
        %p235 = pneg %p121
        %p236 = pneg %p118
        %p237 = pneg %p147
        %p238 = pneg %p144
        %s239 = sand.u32 %s134, 1
        %s240 = scalar_lea.sflag [#allocation6], %s239
        %s241 = sand.u32 %s134, 1
        %s242 = smul.addr %s241, 2
        %s243 = scalar_lea.vmem [#allocation9], %s242
        %v244 = vld [vmem:[%s219] sm:$0xff]
        %v246 = vcombine.high %v244, %v244
        %vm248 = vcmask 1043456
        %v249 = vsel %vm248, %v244, -inf
        %v250 = vrot.slane %v249, 4
        %v251 = vmax.f32 %v249, %v250
        %v252 = vrot.slane %v251, 2
        %v253 = vmax.f32 %v251, %v252
        %v254 = vrot.slane %v253, 1
        %v255 = vmax.f32 %v253, %v254
        %v256 = vsel %vm248, %v246, -inf
        %v257 = vrot.slane %v256, 4
        %v258 = vmax.f32 %v256, %v257
        %v259 = vrot.slane %v258, 2
        %v260 = vmax.f32 %v258, %v259
        %v261 = vrot.slane %v260, 1
        %v262 = vmax.f32 %v260, %v261
        %v263 = vsel %vm248, %v244, 0.0
        %v264 = vrot.slane %v263, 4
        %v265 = vadd.f32 %v263, %v264
        %v266 = vrot.slane %v265, 2
        %v267 = vadd.f32 %v265, %v266
        %v268 = vrot.slane %v267, 1
        %v269 = vadd.f32 %v267, %v268
        %v270 = vsel %vm248, %v246, 0.0
        %v271 = vrot.slane %v270, 4
        %v272 = vadd.f32 %v270, %v271
        %v273 = vrot.slane %v272, 2
        %v274 = vadd.f32 %v272, %v273
        %v275 = vrot.slane %v274, 1
        %v276 = vadd.f32 %v274, %v275
        %p277 = scmp.eq.s32.totalorder %s28, 0
        // Predicated region
        $region45: #{tpu_custom_call.1} parent=35 // pred_check
          %p278 = pneg %p277
        $region46: #{tpu_custom_call.1} parent=35 // pred_check_branch
          %280 = sbr.rel (%p278) target = $region48
        $region47: #{tpu_custom_call.1} parent=35 // pred_region
          %281 = vst [vmem:[#allocation2] sm:$0x3] 0.0
          %282 = vst [vmem:[#allocation2 + $0x6] sm:$0x3] 0.0
          %v285 = vcombine.low %v255, %v262
          %v287 = vunpack.c.l.s4 1966171168
          %v288 = vunpack.c.0.s8 %v287
          %v289 = vlaneseq
          %v290 = vshrl.u32 %v289, 7
          %v291 = vsub.s32 %v288, %v290
          %v292 = vrot.slane %v285, %v291
          %v294 = vunpack.c.l.s4 1966171168
          %v295 = vunpack.c.0.s8 %v294
          %v296 = vlaneseq
          %v297 = vshrl.u32 %v296, 7
          %v298 = vsub.s32 %v295, %v297
          %v299 = vrot.slane %v292, %v298
          %v301 = vlaneseq
          %vm302 = vcmp.ge.s32.totalorder %v301, 0
          %vm303 = vcmp.lt.s32.totalorder %v301, 256
          %vm304 = vmand %vm302, %vm303
          %s305 = scalar_lea.vmem [#allocation2], 2
          %306 = vst.msk [vmem:[%s305] ss:$2 sm:$0x3] %vm304, %v299
          %v309 = vcombine.low %v269, %v276
          %v311 = vunpack.c.l.s4 1966171168
          %v312 = vunpack.c.0.s8 %v311
          %v313 = vlaneseq
          %v314 = vshrl.u32 %v313, 7
          %v315 = vsub.s32 %v312, %v314
          %v316 = vrot.slane %v309, %v315
          %v318 = vunpack.c.l.s4 1966171168
          %v319 = vunpack.c.0.s8 %v318
          %v320 = vlaneseq
          %v321 = vshrl.u32 %v320, 7
          %v322 = vsub.s32 %v319, %v321
          %v323 = vrot.slane %v316, %v322
          %s325 = scalar_lea.vmem [#allocation2], 3
          %326 = vst.msk [vmem:[%s325] ss:$2 sm:$0x3] %vm304, %v323
        $region48: #{tpu_custom_call.1} parent=35 // pred_fallthru
          _
        %p327 = scmp.gt.s32.totalorder %s28, 0
        // Predicated region
        $region49: #{tpu_custom_call.1} parent=35 // pred_check
          %p328 = pneg %p327
        $region50: #{tpu_custom_call.1} parent=35 // pred_check_branch
          %330 = sbr.rel (%p328) target = $region52
        $region51: #{tpu_custom_call.1} parent=35 // pred_region
          %s331 = scalar_lea.vmem [#allocation2], 2
          %v332 = vld [vmem:[%s331] ss:$2 sm:$0x3]
          %v335 = vcombine.low %v255, %v262
          %v337 = vunpack.c.l.s4 1966171168
          %v338 = vunpack.c.0.s8 %v337
          %v339 = vlaneseq
          %v340 = vshrl.u32 %v339, 7
          %v341 = vsub.s32 %v338, %v340
          %v342 = vrot.slane %v335, %v341
          %v344 = vunpack.c.l.s4 1966171168
          %v345 = vunpack.c.0.s8 %v344
          %v346 = vlaneseq
          %v347 = vshrl.u32 %v346, 7
          %v348 = vsub.s32 %v345, %v347
          %v349 = vrot.slane %v342, %v348
          %v351 = vmax.f32 %v332, %v349
          %v352 = vlaneseq
          %vm353 = vcmp.ge.s32.totalorder %v352, 0
          %vm354 = vcmp.lt.s32.totalorder %v352, 256
          %vm355 = vmand %vm353, %vm354
          %356 = vst.msk [vmem:[%s331] ss:$2 sm:$0x3] %vm355, %v351
          %s357 = scalar_lea.vmem [#allocation2], 3
          %v358 = vld [vmem:[%s357] ss:$2 sm:$0x3]
          %v361 = vcombine.low %v269, %v276
          %v363 = vunpack.c.l.s4 1966171168
          %v364 = vunpack.c.0.s8 %v363
          %v365 = vlaneseq
          %v366 = vshrl.u32 %v365, 7
          %v367 = vsub.s32 %v364, %v366
          %v368 = vrot.slane %v361, %v367
          %v370 = vunpack.c.l.s4 1966171168
          %v371 = vunpack.c.0.s8 %v370
          %v372 = vlaneseq
          %v373 = vshrl.u32 %v372, 7
          %v374 = vsub.s32 %v371, %v373
          %v375 = vrot.slane %v368, %v374
          %v377 = vadd.f32 %v358, %v375
          %378 = vst.msk [vmem:[%s357] ss:$2 sm:$0x3] %vm355, %v377
        $region52: #{tpu_custom_call.1} parent=35 // pred_fallthru
          _
        // Predicated region
        $region53: #{tpu_custom_call.1} parent=35 // pred_check
          %p379 = pneg %p277
        $region54: #{tpu_custom_call.1} parent=35 // pred_check_branch
          %381 = sbr.rel (%p379) target = $region56
        $region55: #{tpu_custom_call.1} parent=35 // pred_region
          %v382 = vld [vmem:[#allocation4] sm:$0x3]
          %vm383 = vcmp.ge.s32.totalorder %v382, 3
          %vm384 = vcmp.ge.s32.totalorder %v382, 2
          %vm385 = vcmp.ge.s32.totalorder %v382, 1
          %vm386 = vcmp.lt.s32.totalorder %v382, 15
          %vm387 = vcmp.lt.s32.totalorder %v382, 14
          %vm388 = vcmp.lt.s32.totalorder %v382, 13
          %v389 = vld [vmem:[#allocation2] sm:$0x3f]
          %v390 = vsel %vm383, 1, 0
          %v391 = vlaneseq
          %v392 = vshrl.u32 %v391, 7
          %v393 = vsub.s32 0, %v392
          %v394 = vrot.slane %v390, %v393
          %v395 = vlaneseq
          %v396 = vshrl.u32 %v395, 7
          %v397 = vsub.s32 1, %v396
          %v398 = vrot.slane %v390, %v397
          %vm399 = vcmp.eq.s32.totalorder %v394, 1
          %vm400 = vcmp.eq.s32.totalorder %v398, 1
          %v402 = vcombine.high %v389, %v389
          %v404 = vunpack.c.l.s4 1983009808
          %v405 = vunpack.c.0.s8 %v404
          %v406 = vlaneseq
          %v407 = vshrl.u32 %v406, 7
          %v408 = vsub.s32 %v405, %v407
          %v409 = vrot.slane %v389, %v408
          %v411 = vunpack.c.l.s4 1983009808
          %v412 = vunpack.c.0.s8 %v411
          %v413 = vlaneseq
          %v414 = vshrl.u32 %v413, 7
          %v415 = vsub.s32 %v412, %v414
          %v416 = vrot.slane %v402, %v415
          %v417 = vcombine.high %v409, %v409
          %418 = vrot.lane.b32.xlu0 %v409, 51
          %v419 = vpop.permute.xlu0 %418
          %420 = vrot.lane.b32.xlu0 %v417, 51
          %v421 = vpop.permute.xlu0 %420
          %422 = vrot.lane.b32.xlu0 %v416, 51
          %v423 = vpop.permute.xlu0 %422
          %vm424 = vcmask 416768
          %v425 = vsel %vm424, %v419, %v421
          %v426 = vsel %vm424, %v421, %v423
          %v429 = vsel %vm399, %v425, 0.0
          %v430 = vsel %vm400, %v426, 0.0
          %v431 = vld [vmem:[%s0] sm:$0x3]
          %433 = vset.pattern.permute.xlu0 0
          %434 = vperm.xlu0 %433, %v431
          %v435 = vpop.permute.xlu0 %434
          %v437 = vmul.f32 %v435, %v429
          %v438 = vmul.f32 %v435, %v430
          %v439 = vadd.f32 %v437, 0.0
          %v440 = vadd.f32 %v438, 0.0
          %v441 = vld [vmem:[#allocation2] sm:$0x3f]
          %v442 = vsel %vm384, 1, 0
          %v443 = vlaneseq
          %v444 = vshrl.u32 %v443, 7
          %v445 = vsub.s32 0, %v444
          %v446 = vrot.slane %v442, %v445
          %v447 = vlaneseq
          %v448 = vshrl.u32 %v447, 7
          %v449 = vsub.s32 1, %v448
          %v450 = vrot.slane %v442, %v449
          %vm451 = vcmp.eq.s32.totalorder %v446, 1
          %vm452 = vcmp.eq.s32.totalorder %v450, 1
          %v454 = vcombine.high %v441, %v441
          %v456 = vunpack.c.l.s4 1983009808
          %v457 = vunpack.c.0.s8 %v456
          %v458 = vlaneseq
          %v459 = vshrl.u32 %v458, 7
          %v460 = vsub.s32 %v457, %v459
          %v461 = vrot.slane %v441, %v460
          %v463 = vunpack.c.l.s4 1983009808
          %v464 = vunpack.c.0.s8 %v463
          %v465 = vlaneseq
          %v466 = vshrl.u32 %v465, 7
          %v467 = vsub.s32 %v464, %v466
          %v468 = vrot.slane %v454, %v467
          %v469 = vcombine.high %v461, %v461
          %470 = vrot.lane.b32.xlu0 %v461, 50
          %v471 = vpop.permute.xlu0 %470
          %472 = vrot.lane.b32.xlu0 %v469, 50
          %v473 = vpop.permute.xlu0 %472
          %474 = vrot.lane.b32.xlu0 %v468, 50
          %v475 = vpop.permute.xlu0 %474
          %vm476 = vcmask 408576
          %v477 = vsel %vm476, %v471, %v473
          %v478 = vsel %vm476, %v473, %v475
          %v481 = vsel %vm451, %v477, 0.0
          %v482 = vsel %vm452, %v478, 0.0
          %v483 = vld [vmem:[%s0] sm:$0x3]
          %485 = vset.pattern.permute.xlu0 1
          %486 = vperm.xlu0 %485, %v483
          %v487 = vpop.permute.xlu0 %486
          %v489 = vmul.f32 %v487, %v481
          %v490 = vmul.f32 %v487, %v482
          %v491 = vadd.f32 %v439, %v489
          %v492 = vadd.f32 %v440, %v490
          %v493 = vld [vmem:[#allocation2] sm:$0x3f]
          %v494 = vsel %vm385, 1, 0
          %v495 = vlaneseq
          %v496 = vshrl.u32 %v495, 7
          %v497 = vsub.s32 0, %v496
          %v498 = vrot.slane %v494, %v497
          %v499 = vlaneseq
          %v500 = vshrl.u32 %v499, 7
          %v501 = vsub.s32 1, %v500
          %v502 = vrot.slane %v494, %v501
          %vm503 = vcmp.eq.s32.totalorder %v498, 1
          %vm504 = vcmp.eq.s32.totalorder %v502, 1
          %v506 = vcombine.high %v493, %v493
          %v508 = vunpack.c.l.s4 1983009808
          %v509 = vunpack.c.0.s8 %v508
          %v510 = vlaneseq
          %v511 = vshrl.u32 %v510, 7
          %v512 = vsub.s32 %v509, %v511
          %v513 = vrot.slane %v493, %v512
          %v515 = vunpack.c.l.s4 1983009808
          %v516 = vunpack.c.0.s8 %v515
          %v517 = vlaneseq
          %v518 = vshrl.u32 %v517, 7
          %v519 = vsub.s32 %v516, %v518
          %v520 = vrot.slane %v506, %v519
          %v521 = vcombine.high %v513, %v513
          %522 = vrot.lane.b32.xlu0 %v513, 49
          %v523 = vpop.permute.xlu0 %522
          %524 = vrot.lane.b32.xlu0 %v521, 49
          %v525 = vpop.permute.xlu0 %524
          %526 = vrot.lane.b32.xlu0 %v520, 49
          %v527 = vpop.permute.xlu0 %526
          %vm528 = vcmask 400384
          %v529 = vsel %vm528, %v523, %v525
          %v530 = vsel %vm528, %v525, %v527
          %v533 = vsel %vm503, %v529, 0.0
          %v534 = vsel %vm504, %v530, 0.0
          %v535 = vld [vmem:[%s0] sm:$0x3]
          %537 = vset.pattern.permute.xlu0 2
          %538 = vperm.xlu0 %537, %v535
          %v539 = vpop.permute.xlu0 %538
          %v541 = vmul.f32 %v539, %v533
          %v542 = vmul.f32 %v539, %v534
          %v543 = vadd.f32 %v491, %v541
          %v544 = vadd.f32 %v492, %v542
          %v545 = vld [vmem:[#allocation2] sm:$0x3f]
          %546 = vset.pattern.permute.xlu0 3
          %547 = vperm.xlu0 %546, %v535
          %v548 = vpop.permute.xlu0 %547
          %v551 = vcombine.high %v545, %v545
          %v553 = vunpack.c.l.s4 1983009808
          %v554 = vunpack.c.0.s8 %v553
          %v555 = vlaneseq
          %v556 = vshrl.u32 %v555, 7
          %v557 = vsub.s32 %v554, %v556
          %v558 = vrot.slane %v545, %v557
          %v560 = vunpack.c.l.s4 1983009808
          %v561 = vunpack.c.0.s8 %v560
          %v562 = vlaneseq
          %v563 = vshrl.u32 %v562, 7
          %v564 = vsub.s32 %v561, %v563
          %v565 = vrot.slane %v551, %v564
          %v566 = vcombine.high %v558, %v558
          %567 = vrot.lane.b32.xlu0 %v558, 48
          %v568 = vpop.permute.xlu0 %567
          %569 = vrot.lane.b32.xlu0 %v566, 48
          %v570 = vpop.permute.xlu0 %569
          %571 = vrot.lane.b32.xlu0 %v565, 48
          %v572 = vpop.permute.xlu0 %571
          %vm573 = vcmask 392192
          %v574 = vsel %vm573, %v568, %v570
          %v575 = vsel %vm573, %v570, %v572
          %v578 = vmul.f32 %v548, %v574
          %v579 = vmul.f32 %v548, %v575
          %v580 = vadd.f32 %v543, %v578
          %v581 = vadd.f32 %v544, %v579
          %v582 = vld [vmem:[#allocation2] sm:$0x3f]
          %v583 = vsel %vm386, 1, 0
          %v584 = vlaneseq
          %v585 = vshrl.u32 %v584, 7
          %v586 = vsub.s32 0, %v585
          %v587 = vrot.slane %v583, %v586
          %v588 = vlaneseq
          %v589 = vshrl.u32 %v588, 7
          %v590 = vsub.s32 1, %v589
          %v591 = vrot.slane %v583, %v590
          %vm592 = vcmp.eq.s32.totalorder %v587, 1
          %vm593 = vcmp.eq.s32.totalorder %v591, 1
          %v595 = vcombine.high %v582, %v582
          %v597 = vunpack.c.l.s4 1983009808
          %v598 = vunpack.c.0.s8 %v597
          %v599 = vlaneseq
          %v600 = vshrl.u32 %v599, 7
          %v601 = vsub.s32 %v598, %v600
          %v602 = vrot.slane %v582, %v601
          %v604 = vunpack.c.l.s4 1983009808
          %v605 = vunpack.c.0.s8 %v604
          %v606 = vlaneseq
          %v607 = vshrl.u32 %v606, 7
          %v608 = vsub.s32 %v605, %v607
          %v609 = vrot.slane %v595, %v608
          %v610 = vcombine.high %v602, %v602
          %611 = vrot.lane.b32.xlu0 %v602, 47
          %v612 = vpop.permute.xlu0 %611
          %613 = vrot.lane.b32.xlu0 %v610, 47
          %v614 = vpop.permute.xlu0 %613
          %615 = vrot.lane.b32.xlu0 %v609, 47
          %v616 = vpop.permute.xlu0 %615
          %vm617 = vcmask 384000
          %v618 = vsel %vm617, %v612, %v614
          %v619 = vsel %vm617, %v614, %v616
          %v622 = vsel %vm592, %v618, 0.0
          %v623 = vsel %vm593, %v619, 0.0
          %v624 = vld [vmem:[%s0] sm:$0x3]
          %626 = vset.pattern.permute.xlu0 4
          %627 = vperm.xlu0 %626, %v624
          %v628 = vpop.permute.xlu0 %627
          %v630 = vmul.f32 %v628, %v622
          %v631 = vmul.f32 %v628, %v623
          %v632 = vadd.f32 %v580, %v630
          %v633 = vadd.f32 %v581, %v631
          %v634 = vld [vmem:[#allocation2] sm:$0x3f]
          %v635 = vsel %vm387, 1, 0
          %v636 = vlaneseq
          %v637 = vshrl.u32 %v636, 7
          %v638 = vsub.s32 0, %v637
          %v639 = vrot.slane %v635, %v638
          %v640 = vlaneseq
          %v641 = vshrl.u32 %v640, 7
          %v642 = vsub.s32 1, %v641
          %v643 = vrot.slane %v635, %v642
          %vm644 = vcmp.eq.s32.totalorder %v639, 1
          %vm645 = vcmp.eq.s32.totalorder %v643, 1
          %v647 = vcombine.high %v634, %v634
          %v649 = vunpack.c.l.s4 1983009808
          %v650 = vunpack.c.0.s8 %v649
          %v651 = vlaneseq
          %v652 = vshrl.u32 %v651, 7
          %v653 = vsub.s32 %v650, %v652
          %v654 = vrot.slane %v634, %v653
          %v656 = vunpack.c.l.s4 1983009808
          %v657 = vunpack.c.0.s8 %v656
          %v658 = vlaneseq
          %v659 = vshrl.u32 %v658, 7
          %v660 = vsub.s32 %v657, %v659
          %v661 = vrot.slane %v647, %v660
          %v662 = vcombine.high %v654, %v654
          %663 = vrot.lane.b32.xlu0 %v654, 46
          %v664 = vpop.permute.xlu0 %663
          %665 = vrot.lane.b32.xlu0 %v662, 46
          %v666 = vpop.permute.xlu0 %665
          %667 = vrot.lane.b32.xlu0 %v661, 46
          %v668 = vpop.permute.xlu0 %667
          %vm669 = vcmask 375808
          %v670 = vsel %vm669, %v664, %v666
          %v671 = vsel %vm669, %v666, %v668
          %v674 = vsel %vm644, %v670, 0.0
          %v675 = vsel %vm645, %v671, 0.0
          %v676 = vld [vmem:[%s0] sm:$0x3]
          %678 = vset.pattern.permute.xlu0 5
          %679 = vperm.xlu0 %678, %v676
          %v680 = vpop.permute.xlu0 %679
          %v682 = vmul.f32 %v680, %v674
          %v683 = vmul.f32 %v680, %v675
          %v684 = vadd.f32 %v632, %v682
          %v685 = vadd.f32 %v633, %v683
          %v686 = vld [vmem:[#allocation2] sm:$0x3f]
          %v687 = vsel %vm388, 1, 0
          %v688 = vlaneseq
          %v689 = vshrl.u32 %v688, 7
          %v690 = vsub.s32 0, %v689
          %v691 = vrot.slane %v687, %v690
          %v692 = vlaneseq
          %v693 = vshrl.u32 %v692, 7
          %v694 = vsub.s32 1, %v693
          %v695 = vrot.slane %v687, %v694
          %vm696 = vcmp.eq.s32.totalorder %v691, 1
          %vm697 = vcmp.eq.s32.totalorder %v695, 1
          %v699 = vcombine.high %v686, %v686
          %v701 = vunpack.c.l.s4 1983009808
          %v702 = vunpack.c.0.s8 %v701
          %v703 = vlaneseq
          %v704 = vshrl.u32 %v703, 7
          %v705 = vsub.s32 %v702, %v704
          %v706 = vrot.slane %v686, %v705
          %v708 = vunpack.c.l.s4 1983009808
          %v709 = vunpack.c.0.s8 %v708
          %v710 = vlaneseq
          %v711 = vshrl.u32 %v710, 7
          %v712 = vsub.s32 %v709, %v711
          %v713 = vrot.slane %v699, %v712
          %v714 = vcombine.high %v706, %v706
          %715 = vrot.lane.b32.xlu0 %v706, 45
          %v716 = vpop.permute.xlu0 %715
          %717 = vrot.lane.b32.xlu0 %v714, 45
          %v718 = vpop.permute.xlu0 %717
          %719 = vrot.lane.b32.xlu0 %v713, 45
          %v720 = vpop.permute.xlu0 %719
          %vm721 = vcmask 367616
          %v722 = vsel %vm721, %v716, %v718
          %v723 = vsel %vm721, %v718, %v720
          %v726 = vsel %vm696, %v722, 0.0
          %v727 = vsel %vm697, %v723, 0.0
          %v728 = vld [vmem:[%s0] sm:$0x3]
          %730 = vset.pattern.permute.xlu0 6
          %731 = vperm.xlu0 %730, %v728
          %v732 = vpop.permute.xlu0 %731
          %v734 = vmul.f32 %v732, %v726
          %v735 = vmul.f32 %v732, %v727
          %v736 = vadd.f32 %v684, %v734
          %v737 = vadd.f32 %v685, %v735
          %v738 = vld [vmem:[#allocation2] sm:$0x3f]
          %v740 = vcombine.high %v738, %v738
          %v742 = vunpack.c.l.s4 1983009808
          %v743 = vunpack.c.0.s8 %v742
          %v744 = vlaneseq
          %v745 = vshrl.u32 %v744, 7
          %v746 = vsub.s32 %v743, %v745
          %v747 = vrot.slane %v738, %v746
          %v749 = vunpack.c.l.s4 1983009808
          %v750 = vunpack.c.0.s8 %v749
          %v751 = vlaneseq
          %v752 = vshrl.u32 %v751, 7
          %v753 = vsub.s32 %v750, %v752
          %v754 = vrot.slane %v740, %v753
          %v755 = vcombine.high %v747, %v747
          %756 = vrot.lane.b32.xlu0 %v747, 35
          %v757 = vpop.permute.xlu0 %756
          %758 = vrot.lane.b32.xlu0 %v755, 35
          %v759 = vpop.permute.xlu0 %758
          %760 = vrot.lane.b32.xlu0 %v754, 35
          %v761 = vpop.permute.xlu0 %760
          %vm762 = vcmask 285696
          %v763 = vsel %vm762, %v757, %v759
          %v764 = vsel %vm762, %v759, %v761
          %v767 = vsel %vm399, %v763, 0.0
          %v768 = vsel %vm400, %v764, 0.0
          %v769 = vld [vmem:[%s0] sm:$0x3]
          %771 = vset.pattern.permute.xlu0 7
          %772 = vperm.xlu0 %771, %v769
          %v773 = vpop.permute.xlu0 %772
          %v775 = vmul.f32 %v773, %v767
          %v776 = vmul.f32 %v773, %v768
          %v777 = vadd.f32 %v736, %v775
          %v778 = vadd.f32 %v737, %v776
          %v779 = vld [vmem:[#allocation2] sm:$0x3f]
          %v781 = vcombine.high %v779, %v779
          %v783 = vunpack.c.l.s4 1983009808
          %v784 = vunpack.c.0.s8 %v783
          %v785 = vlaneseq
          %v786 = vshrl.u32 %v785, 7
          %v787 = vsub.s32 %v784, %v786
          %v788 = vrot.slane %v779, %v787
          %v790 = vunpack.c.l.s4 1983009808
          %v791 = vunpack.c.0.s8 %v790
          %v792 = vlaneseq
          %v793 = vshrl.u32 %v792, 7
          %v794 = vsub.s32 %v791, %v793
          %v795 = vrot.slane %v781, %v794
          %v796 = vcombine.high %v788, %v788
          %797 = vrot.lane.b32.xlu0 %v788, 34
          %v798 = vpop.permute.xlu0 %797
          %799 = vrot.lane.b32.xlu0 %v796, 34
          %v800 = vpop.permute.xlu0 %799
          %801 = vrot.lane.b32.xlu0 %v795, 34
          %v802 = vpop.permute.xlu0 %801
          %vm803 = vcmask 277504
          %v804 = vsel %vm803, %v798, %v800
          %v805 = vsel %vm803, %v800, %v802
          %v808 = vsel %vm451, %v804, 0.0
          %v809 = vsel %vm452, %v805, 0.0
          %v810 = vld [vmem:[%s0] sm:$0x3]
          %812 = vset.pattern.permute.xlu0 8
          %813 = vperm.xlu0 %812, %v810
          %v814 = vpop.permute.xlu0 %813
          %v816 = vmul.f32 %v814, %v808
          %v817 = vmul.f32 %v814, %v809
          %v818 = vadd.f32 %v777, %v816
          %v819 = vadd.f32 %v778, %v817
          %v820 = vld [vmem:[#allocation2] sm:$0x3f]
          %v822 = vcombine.high %v820, %v820
          %v824 = vunpack.c.l.s4 1983009808
          %v825 = vunpack.c.0.s8 %v824
          %v826 = vlaneseq
          %v827 = vshrl.u32 %v826, 7
          %v828 = vsub.s32 %v825, %v827
          %v829 = vrot.slane %v820, %v828
          %v831 = vunpack.c.l.s4 1983009808
          %v832 = vunpack.c.0.s8 %v831
          %v833 = vlaneseq
          %v834 = vshrl.u32 %v833, 7
          %v835 = vsub.s32 %v832, %v834
          %v836 = vrot.slane %v822, %v835
          %v837 = vcombine.high %v829, %v829
          %838 = vrot.lane.b32.xlu0 %v829, 33
          %v839 = vpop.permute.xlu0 %838
          %840 = vrot.lane.b32.xlu0 %v837, 33
          %v841 = vpop.permute.xlu0 %840
          %842 = vrot.lane.b32.xlu0 %v836, 33
          %v843 = vpop.permute.xlu0 %842
          %vm844 = vcmask 269312
          %v845 = vsel %vm844, %v839, %v841
          %v846 = vsel %vm844, %v841, %v843
          %v849 = vsel %vm503, %v845, 0.0
          %v850 = vsel %vm504, %v846, 0.0
          %v851 = vld [vmem:[%s0] sm:$0x3]
          %853 = vset.pattern.permute.xlu0 9
          %854 = vperm.xlu0 %853, %v851
          %v855 = vpop.permute.xlu0 %854
          %v857 = vmul.f32 %v855, %v849
          %v858 = vmul.f32 %v855, %v850
          %v859 = vadd.f32 %v818, %v857
          %v860 = vadd.f32 %v819, %v858
          %v861 = vld [vmem:[#allocation2] sm:$0x3f]
          %862 = vset.pattern.permute.xlu0 10
          %863 = vperm.xlu0 %862, %v851
          %v864 = vpop.permute.xlu0 %863
          %v867 = vcombine.high %v861, %v861
          %v869 = vunpack.c.l.s4 1983009808
          %v870 = vunpack.c.0.s8 %v869
          %v871 = vlaneseq
          %v872 = vshrl.u32 %v871, 7
          %v873 = vsub.s32 %v870, %v872
          %v874 = vrot.slane %v861, %v873
          %v876 = vunpack.c.l.s4 1983009808
          %v877 = vunpack.c.0.s8 %v876
          %v878 = vlaneseq
          %v879 = vshrl.u32 %v878, 7
          %v880 = vsub.s32 %v877, %v879
          %v881 = vrot.slane %v867, %v880
          %v882 = vcombine.high %v874, %v874
          %883 = vrot.lane.b32.xlu0 %v874, 32
          %v884 = vpop.permute.xlu0 %883
          %885 = vrot.lane.b32.xlu0 %v882, 32
          %v886 = vpop.permute.xlu0 %885
          %887 = vrot.lane.b32.xlu0 %v881, 32
          %v888 = vpop.permute.xlu0 %887
          %vm889 = vcmask 261120
          %v890 = vsel %vm889, %v884, %v886
          %v891 = vsel %vm889, %v886, %v888
          %v894 = vmul.f32 %v864, %v890
          %v895 = vmul.f32 %v864, %v891
          %v896 = vadd.f32 %v859, %v894
          %v897 = vadd.f32 %v860, %v895
          %v898 = vld [vmem:[#allocation2] sm:$0x3f]
          %v900 = vcombine.high %v898, %v898
          %v902 = vunpack.c.l.s4 1983009808
          %v903 = vunpack.c.0.s8 %v902
          %v904 = vlaneseq
          %v905 = vshrl.u32 %v904, 7
          %v906 = vsub.s32 %v903, %v905
          %v907 = vrot.slane %v898, %v906
          %v909 = vunpack.c.l.s4 1983009808
          %v910 = vunpack.c.0.s8 %v909
          %v911 = vlaneseq
          %v912 = vshrl.u32 %v911, 7
          %v913 = vsub.s32 %v910, %v912
          %v914 = vrot.slane %v900, %v913
          %v915 = vcombine.high %v907, %v907
          %916 = vrot.lane.b32.xlu0 %v907, 31
          %v917 = vpop.permute.xlu0 %916
          %918 = vrot.lane.b32.xlu0 %v915, 31
          %v919 = vpop.permute.xlu0 %918
          %920 = vrot.lane.b32.xlu0 %v914, 31
          %v921 = vpop.permute.xlu0 %920
          %vm922 = vcmask 252928
          %v923 = vsel %vm922, %v917, %v919
          %v924 = vsel %vm922, %v919, %v921
          %v927 = vsel %vm592, %v923, 0.0
          %v928 = vsel %vm593, %v924, 0.0
          %v929 = vld [vmem:[%s0] sm:$0x3]
          %931 = vset.pattern.permute.xlu0 11
          %932 = vperm.xlu0 %931, %v929
          %v933 = vpop.permute.xlu0 %932
          %v935 = vmul.f32 %v933, %v927
          %v936 = vmul.f32 %v933, %v928
          %v937 = vadd.f32 %v896, %v935
          %v938 = vadd.f32 %v897, %v936
          %v939 = vld [vmem:[#allocation2] sm:$0x3f]
          %v941 = vcombine.high %v939, %v939
          %v943 = vunpack.c.l.s4 1983009808
          %v944 = vunpack.c.0.s8 %v943
          %v945 = vlaneseq
          %v946 = vshrl.u32 %v945, 7
          %v947 = vsub.s32 %v944, %v946
          %v948 = vrot.slane %v939, %v947
          %v950 = vunpack.c.l.s4 1983009808
          %v951 = vunpack.c.0.s8 %v950
          %v952 = vlaneseq
          %v953 = vshrl.u32 %v952, 7
          %v954 = vsub.s32 %v951, %v953
          %v955 = vrot.slane %v941, %v954
          %v956 = vcombine.high %v948, %v948
          %957 = vrot.lane.b32.xlu0 %v948, 30
          %v958 = vpop.permute.xlu0 %957
          %959 = vrot.lane.b32.xlu0 %v956, 30
          %v960 = vpop.permute.xlu0 %959
          %961 = vrot.lane.b32.xlu0 %v955, 30
          %v962 = vpop.permute.xlu0 %961
          %vm963 = vcmask 244736
          %v964 = vsel %vm963, %v958, %v960
          %v965 = vsel %vm963, %v960, %v962
          %v968 = vsel %vm644, %v964, 0.0
          %v969 = vsel %vm645, %v965, 0.0
          %v970 = vld [vmem:[%s0] sm:$0x3]
          %972 = vset.pattern.permute.xlu0 12
          %973 = vperm.xlu0 %972, %v970
          %v974 = vpop.permute.xlu0 %973
          %v976 = vmul.f32 %v974, %v968
          %v977 = vmul.f32 %v974, %v969
          %v978 = vadd.f32 %v937, %v976
          %v979 = vadd.f32 %v938, %v977
          %v980 = vld [vmem:[#allocation2] sm:$0x3f]
          %v982 = vcombine.high %v980, %v980
          %v984 = vunpack.c.l.s4 1983009808
          %v985 = vunpack.c.0.s8 %v984
          %v986 = vlaneseq
          %v987 = vshrl.u32 %v986, 7
          %v988 = vsub.s32 %v985, %v987
          %v989 = vrot.slane %v980, %v988
          %v991 = vunpack.c.l.s4 1983009808
          %v992 = vunpack.c.0.s8 %v991
          %v993 = vlaneseq
          %v994 = vshrl.u32 %v993, 7
          %v995 = vsub.s32 %v992, %v994
          %v996 = vrot.slane %v982, %v995
          %v997 = vcombine.high %v989, %v989
          %998 = vrot.lane.b32.xlu0 %v989, 29
          %v999 = vpop.permute.xlu0 %998
          %1000 = vrot.lane.b32.xlu0 %v997, 29
          %v1001 = vpop.permute.xlu0 %1000
          %1002 = vrot.lane.b32.xlu0 %v996, 29
          %v1003 = vpop.permute.xlu0 %1002
          %vm1004 = vcmask 236544
          %v1005 = vsel %vm1004, %v999, %v1001
          %v1006 = vsel %vm1004, %v1001, %v1003
          %v1009 = vsel %vm696, %v1005, 0.0
          %v1010 = vsel %vm697, %v1006, 0.0
          %v1011 = vld [vmem:[%s0] sm:$0x3]
          %1013 = vset.pattern.permute.xlu0 13
          %1014 = vperm.xlu0 %1013, %v1011
          %v1015 = vpop.permute.xlu0 %1014
          %v1017 = vmul.f32 %v1015, %v1009
          %v1018 = vmul.f32 %v1015, %v1010
          %v1019 = vadd.f32 %v978, %v1017
          %v1020 = vadd.f32 %v979, %v1018
          %v1021 = vld [vmem:[#allocation2] sm:$0x3f]
          %v1023 = vcombine.high %v1021, %v1021
          %v1025 = vunpack.c.l.s4 1983009808
          %v1026 = vunpack.c.0.s8 %v1025
          %v1027 = vlaneseq
          %v1028 = vshrl.u32 %v1027, 7
          %v1029 = vsub.s32 %v1026, %v1028
          %v1030 = vrot.slane %v1021, %v1029
          %v1032 = vunpack.c.l.s4 1983009808
          %v1033 = vunpack.c.0.s8 %v1032
          %v1034 = vlaneseq
          %v1035 = vshrl.u32 %v1034, 7
          %v1036 = vsub.s32 %v1033, %v1035
          %v1037 = vrot.slane %v1023, %v1036
          %v1038 = vcombine.high %v1030, %v1030
          %1039 = vrot.lane.b32.xlu0 %v1030, 19
          %v1040 = vpop.permute.xlu0 %1039
          %1041 = vrot.lane.b32.xlu0 %v1038, 19
          %v1042 = vpop.permute.xlu0 %1041
          %1043 = vrot.lane.b32.xlu0 %v1037, 19
          %v1044 = vpop.permute.xlu0 %1043
          %vm1045 = vcmask 154624
          %v1046 = vsel %vm1045, %v1040, %v1042
          %v1047 = vsel %vm1045, %v1042, %v1044
          %v1050 = vsel %vm399, %v1046, 0.0
          %v1051 = vsel %vm400, %v1047, 0.0
          %v1052 = vld [vmem:[%s0] sm:$0x3]
          %1054 = vset.pattern.permute.xlu0 14
          %1055 = vperm.xlu0 %1054, %v1052
          %v1056 = vpop.permute.xlu0 %1055
          %v1058 = vmul.f32 %v1056, %v1050
          %v1059 = vmul.f32 %v1056, %v1051
          %v1060 = vadd.f32 %v1019, %v1058
          %v1061 = vadd.f32 %v1020, %v1059
          %v1062 = vld [vmem:[#allocation2] sm:$0x3f]
          %v1064 = vcombine.high %v1062, %v1062
          %v1066 = vunpack.c.l.s4 1983009808
          %v1067 = vunpack.c.0.s8 %v1066
          %v1068 = vlaneseq
          %v1069 = vshrl.u32 %v1068, 7
          %v1070 = vsub.s32 %v1067, %v1069
          %v1071 = vrot.slane %v1062, %v1070
          %v1073 = vunpack.c.l.s4 1983009808
          %v1074 = vunpack.c.0.s8 %v1073
          %v1075 = vlaneseq
          %v1076 = vshrl.u32 %v1075, 7
          %v1077 = vsub.s32 %v1074, %v1076
          %v1078 = vrot.slane %v1064, %v1077
          %v1079 = vcombine.high %v1071, %v1071
          %1080 = vrot.lane.b32.xlu0 %v1071, 18
          %v1081 = vpop.permute.xlu0 %1080
          %1082 = vrot.lane.b32.xlu0 %v1079, 18
          %v1083 = vpop.permute.xlu0 %1082
          %1084 = vrot.lane.b32.xlu0 %v1078, 18
          %v1085 = vpop.permute.xlu0 %1084
          %vm1086 = vcmask 146432
          %v1087 = vsel %vm1086, %v1081, %v1083
          %v1088 = vsel %vm1086, %v1083, %v1085
          %v1091 = vsel %vm451, %v1087, 0.0
          %v1092 = vsel %vm452, %v1088, 0.0
          %v1093 = vld [vmem:[%s0] sm:$0x3]
          %1095 = vset.pattern.permute.xlu0 15
          %1096 = vperm.xlu0 %1095, %v1093
          %v1097 = vpop.permute.xlu0 %1096
          %v1099 = vmul.f32 %v1097, %v1091
          %v1100 = vmul.f32 %v1097, %v1092
          %v1101 = vadd.f32 %v1060, %v1099
          %v1102 = vadd.f32 %v1061, %v1100
          %v1103 = vld [vmem:[#allocation2] sm:$0x3f]
          %v1105 = vcombine.high %v1103, %v1103
          %v1107 = vunpack.c.l.s4 1983009808
          %v1108 = vunpack.c.0.s8 %v1107
          %v1109 = vlaneseq
          %v1110 = vshrl.u32 %v1109, 7
          %v1111 = vsub.s32 %v1108, %v1110
          %v1112 = vrot.slane %v1103, %v1111
          %v1114 = vunpack.c.l.s4 1983009808
          %v1115 = vunpack.c.0.s8 %v1114
          %v1116 = vlaneseq
          %v1117 = vshrl.u32 %v1116, 7
          %v1118 = vsub.s32 %v1115, %v1117
          %v1119 = vrot.slane %v1105, %v1118
          %v1120 = vcombine.high %v1112, %v1112
          %1121 = vrot.lane.b32.xlu0 %v1112, 17
          %v1122 = vpop.permute.xlu0 %1121
          %1123 = vrot.lane.b32.xlu0 %v1120, 17
          %v1124 = vpop.permute.xlu0 %1123
          %1125 = vrot.lane.b32.xlu0 %v1119, 17
          %v1126 = vpop.permute.xlu0 %1125
          %vm1127 = vcmask 138240
          %v1128 = vsel %vm1127, %v1122, %v1124
          %v1129 = vsel %vm1127, %v1124, %v1126
          %v1132 = vsel %vm503, %v1128, 0.0
          %v1133 = vsel %vm504, %v1129, 0.0
          %v1134 = vld [vmem:[%s0] sm:$0x3]
          %1136 = vset.pattern.permute.xlu0 16
          %1137 = vperm.xlu0 %1136, %v1134
          %v1138 = vpop.permute.xlu0 %1137
          %v1140 = vmul.f32 %v1138, %v1132
          %v1141 = vmul.f32 %v1138, %v1133
          %v1142 = vadd.f32 %v1101, %v1140
          %v1143 = vadd.f32 %v1102, %v1141
          %v1144 = vld [vmem:[#allocation2] sm:$0x3f]
          %1145 = vset.pattern.permute.xlu0 17
          %1146 = vperm.xlu0 %1145, %v1134
          %v1147 = vpop.permute.xlu0 %1146
          %v1150 = vcombine.high %v1144, %v1144
          %v1152 = vunpack.c.l.s4 1983009808
          %v1153 = vunpack.c.0.s8 %v1152
          %v1154 = vlaneseq
          %v1155 = vshrl.u32 %v1154, 7
          %v1156 = vsub.s32 %v1153, %v1155
          %v1157 = vrot.slane %v1144, %v1156
          %v1159 = vunpack.c.l.s4 1983009808
          %v1160 = vunpack.c.0.s8 %v1159
          %v1161 = vlaneseq
          %v1162 = vshrl.u32 %v1161, 7
          %v1163 = vsub.s32 %v1160, %v1162
          %v1164 = vrot.slane %v1150, %v1163
          %v1165 = vcombine.high %v1157, %v1157
          %1166 = vrot.lane.b32.xlu0 %v1157, 16
          %v1167 = vpop.permute.xlu0 %1166
          %1168 = vrot.lane.b32.xlu0 %v1165, 16
          %v1169 = vpop.permute.xlu0 %1168
          %1170 = vrot.lane.b32.xlu0 %v1164, 16
          %v1171 = vpop.permute.xlu0 %1170
          %vm1172 = vcmask 130048
          %v1173 = vsel %vm1172, %v1167, %v1169
          %v1174 = vsel %vm1172, %v1169, %v1171
          %v1177 = vmul.f32 %v1147, %v1173
          %v1178 = vmul.f32 %v1147, %v1174
          %v1179 = vadd.f32 %v1142, %v1177
          %v1180 = vadd.f32 %v1143, %v1178
          %v1181 = vld [vmem:[#allocation2] sm:$0x3f]
          %v1183 = vcombine.high %v1181, %v1181
          %v1185 = vunpack.c.l.s4 1983009808
          %v1186 = vunpack.c.0.s8 %v1185
          %v1187 = vlaneseq
          %v1188 = vshrl.u32 %v1187, 7
          %v1189 = vsub.s32 %v1186, %v1188
          %v1190 = vrot.slane %v1181, %v1189
          %v1192 = vunpack.c.l.s4 1983009808
          %v1193 = vunpack.c.0.s8 %v1192
          %v1194 = vlaneseq
          %v1195 = vshrl.u32 %v1194, 7
          %v1196 = vsub.s32 %v1193, %v1195
          %v1197 = vrot.slane %v1183, %v1196
          %v1198 = vcombine.high %v1190, %v1190
          %1199 = vrot.lane.b32.xlu0 %v1190, 15
          %v1200 = vpop.permute.xlu0 %1199
          %1201 = vrot.lane.b32.xlu0 %v1198, 15
          %v1202 = vpop.permute.xlu0 %1201
          %1203 = vrot.lane.b32.xlu0 %v1197, 15
          %v1204 = vpop.permute.xlu0 %1203
          %vm1205 = vcmask 121856
          %v1206 = vsel %vm1205, %v1200, %v1202
          %v1207 = vsel %vm1205, %v1202, %v1204
          %v1210 = vsel %vm592, %v1206, 0.0
          %v1211 = vsel %vm593, %v1207, 0.0
          %v1212 = vld [vmem:[%s0] sm:$0x3]
          %1214 = vset.pattern.permute.xlu0 18
          %1215 = vperm.xlu0 %1214, %v1212
          %v1216 = vpop.permute.xlu0 %1215
          %v1218 = vmul.f32 %v1216, %v1210
          %v1219 = vmul.f32 %v1216, %v1211
          %v1220 = vadd.f32 %v1179, %v1218
          %v1221 = vadd.f32 %v1180, %v1219
          %v1222 = vld [vmem:[#allocation2] sm:$0x3f]
          %v1224 = vcombine.high %v1222, %v1222
          %v1226 = vunpack.c.l.s4 1983009808
          %v1227 = vunpack.c.0.s8 %v1226
          %v1228 = vlaneseq
          %v1229 = vshrl.u32 %v1228, 7
          %v1230 = vsub.s32 %v1227, %v1229
          %v1231 = vrot.slane %v1222, %v1230
          %v1233 = vunpack.c.l.s4 1983009808
          %v1234 = vunpack.c.0.s8 %v1233
          %v1235 = vlaneseq
          %v1236 = vshrl.u32 %v1235, 7
          %v1237 = vsub.s32 %v1234, %v1236
          %v1238 = vrot.slane %v1224, %v1237
          %v1239 = vcombine.high %v1231, %v1231
          %1240 = vrot.lane.b32.xlu0 %v1231, 14
          %v1241 = vpop.permute.xlu0 %1240
          %1242 = vrot.lane.b32.xlu0 %v1239, 14
          %v1243 = vpop.permute.xlu0 %1242
          %1244 = vrot.lane.b32.xlu0 %v1238, 14
          %v1245 = vpop.permute.xlu0 %1244
          %vm1246 = vcmask 113664
          %v1247 = vsel %vm1246, %v1241, %v1243
          %v1248 = vsel %vm1246, %v1243, %v1245
          %v1251 = vsel %vm644, %v1247, 0.0
          %v1252 = vsel %vm645, %v1248, 0.0
          %v1253 = vld [vmem:[%s0] sm:$0x3]
          %1255 = vset.pattern.permute.xlu0 19
          %1256 = vperm.xlu0 %1255, %v1253
          %v1257 = vpop.permute.xlu0 %1256
          %v1259 = vmul.f32 %v1257, %v1251
          %v1260 = vmul.f32 %v1257, %v1252
          %v1261 = vadd.f32 %v1220, %v1259
          %v1262 = vadd.f32 %v1221, %v1260
          %v1263 = vld [vmem:[#allocation2] sm:$0x3f]
          %v1265 = vcombine.high %v1263, %v1263
          %v1267 = vunpack.c.l.s4 1983009808
          %v1268 = vunpack.c.0.s8 %v1267
          %v1269 = vlaneseq
          %v1270 = vshrl.u32 %v1269, 7
          %v1271 = vsub.s32 %v1268, %v1270
          %v1272 = vrot.slane %v1263, %v1271
          %v1274 = vunpack.c.l.s4 1983009808
          %v1275 = vunpack.c.0.s8 %v1274
          %v1276 = vlaneseq
          %v1277 = vshrl.u32 %v1276, 7
          %v1278 = vsub.s32 %v1275, %v1277
          %v1279 = vrot.slane %v1265, %v1278
          %v1280 = vcombine.high %v1272, %v1272
          %1281 = vrot.lane.b32.xlu0 %v1272, 13
          %v1282 = vpop.permute.xlu0 %1281
          %1283 = vrot.lane.b32.xlu0 %v1280, 13
          %v1284 = vpop.permute.xlu0 %1283
          %1285 = vrot.lane.b32.xlu0 %v1279, 13
          %v1286 = vpop.permute.xlu0 %1285
          %vm1287 = vcmask 105472
          %v1288 = vsel %vm1287, %v1282, %v1284
          %v1289 = vsel %vm1287, %v1284, %v1286
          %v1292 = vsel %vm696, %v1288, 0.0
          %v1293 = vsel %vm697, %v1289, 0.0
          %v1294 = vld [vmem:[%s0] sm:$0x3]
          %1296 = vset.pattern.permute.xlu0 20
          %1297 = vperm.xlu0 %1296, %v1294
          %v1298 = vpop.permute.xlu0 %1297
          %v1300 = vmul.f32 %v1298, %v1292
          %v1301 = vmul.f32 %v1298, %v1293
          %v1302 = vadd.f32 %v1261, %v1300
          %v1303 = vadd.f32 %v1262, %v1301
          %v1304 = vld [vmem:[#allocation2] sm:$0x3f]
          %v1306 = vcombine.high %v1304, %v1304
          %v1308 = vunpack.c.l.s4 1983009808
          %v1309 = vunpack.c.0.s8 %v1308
          %v1310 = vlaneseq
          %v1311 = vshrl.u32 %v1310, 7
          %v1312 = vsub.s32 %v1309, %v1311
          %v1313 = vrot.slane %v1304, %v1312
          %v1315 = vunpack.c.l.s4 1983009808
          %v1316 = vunpack.c.0.s8 %v1315
          %v1317 = vlaneseq
          %v1318 = vshrl.u32 %v1317, 7
          %v1319 = vsub.s32 %v1316, %v1318
          %v1320 = vrot.slane %v1306, %v1319
          %v1321 = vcombine.high %v1313, %v1313
          %1322 = vrot.lane.b32.xlu0 %v1313, 3
          %v1323 = vpop.permute.xlu0 %1322
          %1324 = vrot.lane.b32.xlu0 %v1321, 3
          %v1325 = vpop.permute.xlu0 %1324
          %1326 = vrot.lane.b32.xlu0 %v1320, 3
          %v1327 = vpop.permute.xlu0 %1326
          %vm1328 = vcmask 23552
          %v1329 = vsel %vm1328, %v1323, %v1325
          %v1330 = vsel %vm1328, %v1325, %v1327
          %v1333 = vsel %vm399, %v1329, 0.0
          %v1334 = vsel %vm400, %v1330, 0.0
          %v1335 = vld [vmem:[%s0] sm:$0x3]
          %1337 = vset.pattern.permute.xlu0 21
          %1338 = vperm.xlu0 %1337, %v1335
          %v1339 = vpop.permute.xlu0 %1338
          %v1341 = vmul.f32 %v1339, %v1333
          %v1342 = vmul.f32 %v1339, %v1334
          %v1343 = vadd.f32 %v1302, %v1341
          %v1344 = vadd.f32 %v1303, %v1342
          %v1345 = vld [vmem:[#allocation2] sm:$0x3f]
          %v1347 = vcombine.high %v1345, %v1345
          %v1349 = vunpack.c.l.s4 1983009808
          %v1350 = vunpack.c.0.s8 %v1349
          %v1351 = vlaneseq
          %v1352 = vshrl.u32 %v1351, 7
          %v1353 = vsub.s32 %v1350, %v1352
          %v1354 = vrot.slane %v1345, %v1353
          %v1356 = vunpack.c.l.s4 1983009808
          %v1357 = vunpack.c.0.s8 %v1356
          %v1358 = vlaneseq
          %v1359 = vshrl.u32 %v1358, 7
          %v1360 = vsub.s32 %v1357, %v1359
          %v1361 = vrot.slane %v1347, %v1360
          %v1362 = vcombine.high %v1354, %v1354
          %1363 = vrot.lane.b32.xlu0 %v1354, 2
          %v1364 = vpop.permute.xlu0 %1363
          %1365 = vrot.lane.b32.xlu0 %v1362, 2
          %v1366 = vpop.permute.xlu0 %1365
          %1367 = vrot.lane.b32.xlu0 %v1361, 2
          %v1368 = vpop.permute.xlu0 %1367
          %vm1369 = vcmask 15360
          %v1370 = vsel %vm1369, %v1364, %v1366
          %v1371 = vsel %vm1369, %v1366, %v1368
          %v1374 = vsel %vm451, %v1370, 0.0
          %v1375 = vsel %vm452, %v1371, 0.0
          %v1376 = vld [vmem:[%s0] sm:$0x3]
          %1378 = vset.pattern.permute.xlu0 22
          %1379 = vperm.xlu0 %1378, %v1376
          %v1380 = vpop.permute.xlu0 %1379
          %v1382 = vmul.f32 %v1380, %v1374
          %v1383 = vmul.f32 %v1380, %v1375
          %v1384 = vadd.f32 %v1343, %v1382
          %v1385 = vadd.f32 %v1344, %v1383
          %v1386 = vld [vmem:[#allocation2] sm:$0x3f]
          %v1388 = vcombine.high %v1386, %v1386
          %v1390 = vunpack.c.l.s4 1983009808
          %v1391 = vunpack.c.0.s8 %v1390
          %v1392 = vlaneseq
          %v1393 = vshrl.u32 %v1392, 7
          %v1394 = vsub.s32 %v1391, %v1393
          %v1395 = vrot.slane %v1386, %v1394
          %v1397 = vunpack.c.l.s4 1983009808
          %v1398 = vunpack.c.0.s8 %v1397
          %v1399 = vlaneseq
          %v1400 = vshrl.u32 %v1399, 7
          %v1401 = vsub.s32 %v1398, %v1400
          %v1402 = vrot.slane %v1388, %v1401
          %v1403 = vcombine.high %v1395, %v1395
          %1404 = vrot.lane.b32.xlu0 %v1395, 1
          %v1405 = vpop.permute.xlu0 %1404
          %1406 = vrot.lane.b32.xlu0 %v1403, 1
          %v1407 = vpop.permute.xlu0 %1406
          %1408 = vrot.lane.b32.xlu0 %v1402, 1
          %v1409 = vpop.permute.xlu0 %1408
          %vm1410 = vcmask 7168
          %v1411 = vsel %vm1410, %v1405, %v1407
          %v1412 = vsel %vm1410, %v1407, %v1409
          %v1415 = vsel %vm503, %v1411, 0.0
          %v1416 = vsel %vm504, %v1412, 0.0
          %v1417 = vld [vmem:[%s0] sm:$0x3]
          %1419 = vset.pattern.permute.xlu0 23
          %1420 = vperm.xlu0 %1419, %v1417
          %v1421 = vpop.permute.xlu0 %1420
          %v1423 = vmul.f32 %v1421, %v1415
          %v1424 = vmul.f32 %v1421, %v1416
          %v1425 = vadd.f32 %v1384, %v1423
          %v1426 = vadd.f32 %v1385, %v1424
          %v1427 = vld [vmem:[#allocation2 + $0x2] sm:$0xf]
          %1428 = vset.pattern.permute.xlu0 24
          %1429 = vperm.xlu0 %1428, %v1417
          %v1430 = vpop.permute.xlu0 %1429
          %v1434 = vunpack.c.l.s4 1983009808
          %v1435 = vunpack.c.0.s8 %v1434
          %v1436 = vlaneseq
          %v1437 = vshrl.u32 %v1436, 7
          %v1438 = vsub.s32 %v1435, %v1437
          %v1439 = vrot.slane %v1427, %v1438
          %v1440 = vcombine.high %v1439, %v1439
          %v1443 = vmul.f32 %v1430, %v1439
          %v1444 = vmul.f32 %v1430, %v1440
          %v1445 = vadd.f32 %v1425, %v1443
          %v1446 = vadd.f32 %v1426, %v1444
          %v1447 = vld [vmem:[#allocation2 + $0x2] sm:$0x3f]
          %v1449 = vcombine.high %v1447, %v1447
          %v1451 = vunpack.c.l.s4 1983009808
          %v1452 = vunpack.c.0.s8 %v1451
          %v1453 = vlaneseq
          %v1454 = vshrl.u32 %v1453, 7
          %v1455 = vsub.s32 %v1452, %v1454
          %v1456 = vrot.slane %v1447, %v1455
          %v1458 = vunpack.c.l.s4 1983009808
          %v1459 = vunpack.c.0.s8 %v1458
          %v1460 = vlaneseq
          %v1461 = vshrl.u32 %v1460, 7
          %v1462 = vsub.s32 %v1459, %v1461
          %v1463 = vrot.slane %v1449, %v1462
          %v1464 = vcombine.high %v1456, %v1456
          %1465 = vrot.lane.b32.xlu0 %v1456, 127
          %v1466 = vpop.permute.xlu0 %1465
          %1467 = vrot.lane.b32.xlu0 %v1464, 127
          %v1468 = vpop.permute.xlu0 %1467
          %1469 = vrot.lane.b32.xlu0 %v1463, 127
          %v1470 = vpop.permute.xlu0 %1469
          %vm1471 = vcmask 1039360
          %v1472 = vsel %vm1471, %v1466, %v1468
          %v1473 = vsel %vm1471, %v1468, %v1470
          %v1476 = vsel %vm592, %v1472, 0.0
          %v1477 = vsel %vm593, %v1473, 0.0
          %v1478 = vld [vmem:[%s0] sm:$0x3]
          %1480 = vset.pattern.permute.xlu0 25
          %1481 = vperm.xlu0 %1480, %v1478
          %v1482 = vpop.permute.xlu0 %1481
          %v1484 = vmul.f32 %v1482, %v1476
          %v1485 = vmul.f32 %v1482, %v1477
          %v1486 = vadd.f32 %v1445, %v1484
          %v1487 = vadd.f32 %v1446, %v1485
          %v1488 = vld [vmem:[#allocation2 + $0x2] sm:$0x3f]
          %v1490 = vcombine.high %v1488, %v1488
          %v1492 = vunpack.c.l.s4 1983009808
          %v1493 = vunpack.c.0.s8 %v1492
          %v1494 = vlaneseq
          %v1495 = vshrl.u32 %v1494, 7
          %v1496 = vsub.s32 %v1493, %v1495
          %v1497 = vrot.slane %v1488, %v1496
          %v1499 = vunpack.c.l.s4 1983009808
          %v1500 = vunpack.c.0.s8 %v1499
          %v1501 = vlaneseq
          %v1502 = vshrl.u32 %v1501, 7
          %v1503 = vsub.s32 %v1500, %v1502
          %v1504 = vrot.slane %v1490, %v1503
          %v1505 = vcombine.high %v1497, %v1497
          %1506 = vrot.lane.b32.xlu0 %v1497, 126
          %v1507 = vpop.permute.xlu0 %1506
          %1508 = vrot.lane.b32.xlu0 %v1505, 126
          %v1509 = vpop.permute.xlu0 %1508
          %1510 = vrot.lane.b32.xlu0 %v1504, 126
          %v1511 = vpop.permute.xlu0 %1510
          %vm1512 = vcmask 1031168
          %v1513 = vsel %vm1512, %v1507, %v1509
          %v1514 = vsel %vm1512, %v1509, %v1511
          %v1517 = vsel %vm644, %v1513, 0.0
          %v1518 = vsel %vm645, %v1514, 0.0
          %v1519 = vld [vmem:[%s0] sm:$0x3]
          %1521 = vset.pattern.permute.xlu0 26
          %1522 = vperm.xlu0 %1521, %v1519
          %v1523 = vpop.permute.xlu0 %1522
          %v1525 = vmul.f32 %v1523, %v1517
          %v1526 = vmul.f32 %v1523, %v1518
          %v1527 = vadd.f32 %v1486, %v1525
          %v1528 = vadd.f32 %v1487, %v1526
          %v1529 = vld [vmem:[#allocation2 + $0x2] sm:$0x3f]
          %v1531 = vcombine.high %v1529, %v1529
          %v1533 = vunpack.c.l.s4 1983009808
          %v1534 = vunpack.c.0.s8 %v1533
          %v1535 = vlaneseq
          %v1536 = vshrl.u32 %v1535, 7
          %v1537 = vsub.s32 %v1534, %v1536
          %v1538 = vrot.slane %v1529, %v1537
          %v1540 = vunpack.c.l.s4 1983009808
          %v1541 = vunpack.c.0.s8 %v1540
          %v1542 = vlaneseq
          %v1543 = vshrl.u32 %v1542, 7
          %v1544 = vsub.s32 %v1541, %v1543
          %v1545 = vrot.slane %v1531, %v1544
          %v1546 = vcombine.high %v1538, %v1538
          %1547 = vrot.lane.b32.xlu0 %v1538, 125
          %v1548 = vpop.permute.xlu0 %1547
          %1549 = vrot.lane.b32.xlu0 %v1546, 125
          %v1550 = vpop.permute.xlu0 %1549
          %1551 = vrot.lane.b32.xlu0 %v1545, 125
          %v1552 = vpop.permute.xlu0 %1551
          %vm1553 = vcmask 1022976
          %v1554 = vsel %vm1553, %v1548, %v1550
          %v1555 = vsel %vm1553, %v1550, %v1552
          %v1558 = vsel %vm696, %v1554, 0.0
          %v1559 = vsel %vm697, %v1555, 0.0
          %v1560 = vld [vmem:[%s0] sm:$0x3]
          %1562 = vset.pattern.permute.xlu0 27
          %1563 = vperm.xlu0 %1562, %v1560
          %v1564 = vpop.permute.xlu0 %1563
          %v1566 = vmul.f32 %v1564, %v1558
          %v1567 = vmul.f32 %v1564, %v1559
          %v1568 = vadd.f32 %v1527, %v1566
          %v1569 = vadd.f32 %v1528, %v1567
          %v1570 = vld [vmem:[#allocation2 + $0x2] sm:$0x3f]
          %v1572 = vcombine.high %v1570, %v1570
          %v1574 = vunpack.c.l.s4 1983009808
          %v1575 = vunpack.c.0.s8 %v1574
          %v1576 = vlaneseq
          %v1577 = vshrl.u32 %v1576, 7
          %v1578 = vsub.s32 %v1575, %v1577
          %v1579 = vrot.slane %v1570, %v1578
          %v1581 = vunpack.c.l.s4 1983009808
          %v1582 = vunpack.c.0.s8 %v1581
          %v1583 = vlaneseq
          %v1584 = vshrl.u32 %v1583, 7
          %v1585 = vsub.s32 %v1582, %v1584
          %v1586 = vrot.slane %v1572, %v1585
          %v1587 = vcombine.high %v1579, %v1579
          %1588 = vrot.lane.b32.xlu0 %v1579, 115
          %v1589 = vpop.permute.xlu0 %1588
          %1590 = vrot.lane.b32.xlu0 %v1587, 115
          %v1591 = vpop.permute.xlu0 %1590
          %1592 = vrot.lane.b32.xlu0 %v1586, 115
          %v1593 = vpop.permute.xlu0 %1592
          %vm1594 = vcmask 941056
          %v1595 = vsel %vm1594, %v1589, %v1591
          %v1596 = vsel %vm1594, %v1591, %v1593
          %v1599 = vsel %vm399, %v1595, 0.0
          %v1600 = vsel %vm400, %v1596, 0.0
          %v1601 = vld [vmem:[%s0] sm:$0x3]
          %1603 = vset.pattern.permute.xlu0 28
          %1604 = vperm.xlu0 %1603, %v1601
          %v1605 = vpop.permute.xlu0 %1604
          %v1607 = vmul.f32 %v1605, %v1599
          %v1608 = vmul.f32 %v1605, %v1600
          %v1609 = vadd.f32 %v1568, %v1607
          %v1610 = vadd.f32 %v1569, %v1608
          %v1611 = vld [vmem:[#allocation2 + $0x2] sm:$0x3f]
          %v1613 = vcombine.high %v1611, %v1611
          %v1615 = vunpack.c.l.s4 1983009808
          %v1616 = vunpack.c.0.s8 %v1615
          %v1617 = vlaneseq
          %v1618 = vshrl.u32 %v1617, 7
          %v1619 = vsub.s32 %v1616, %v1618
          %v1620 = vrot.slane %v1611, %v1619
          %v1622 = vunpack.c.l.s4 1983009808
          %v1623 = vunpack.c.0.s8 %v1622
          %v1624 = vlaneseq
          %v1625 = vshrl.u32 %v1624, 7
          %v1626 = vsub.s32 %v1623, %v1625
          %v1627 = vrot.slane %v1613, %v1626
          %v1628 = vcombine.high %v1620, %v1620
          %1629 = vrot.lane.b32.xlu0 %v1620, 114
          %v1630 = vpop.permute.xlu0 %1629
          %1631 = vrot.lane.b32.xlu0 %v1628, 114
          %v1632 = vpop.permute.xlu0 %1631
          %1633 = vrot.lane.b32.xlu0 %v1627, 114
          %v1634 = vpop.permute.xlu0 %1633
          %vm1635 = vcmask 932864
          %v1636 = vsel %vm1635, %v1630, %v1632
          %v1637 = vsel %vm1635, %v1632, %v1634
          %v1640 = vsel %vm451, %v1636, 0.0
          %v1641 = vsel %vm452, %v1637, 0.0
          %v1642 = vld [vmem:[%s0] sm:$0x3]
          %1644 = vset.pattern.permute.xlu0 29
          %1645 = vperm.xlu0 %1644, %v1642
          %v1646 = vpop.permute.xlu0 %1645
          %v1648 = vmul.f32 %v1646, %v1640
          %v1649 = vmul.f32 %v1646, %v1641
          %v1650 = vadd.f32 %v1609, %v1648
          %v1651 = vadd.f32 %v1610, %v1649
          %v1652 = vld [vmem:[#allocation2 + $0x2] sm:$0x3f]
          %v1654 = vcombine.high %v1652, %v1652
          %v1656 = vunpack.c.l.s4 1983009808
          %v1657 = vunpack.c.0.s8 %v1656
          %v1658 = vlaneseq
          %v1659 = vshrl.u32 %v1658, 7
          %v1660 = vsub.s32 %v1657, %v1659
          %v1661 = vrot.slane %v1652, %v1660
          %v1663 = vunpack.c.l.s4 1983009808
          %v1664 = vunpack.c.0.s8 %v1663
          %v1665 = vlaneseq
          %v1666 = vshrl.u32 %v1665, 7
          %v1667 = vsub.s32 %v1664, %v1666
          %v1668 = vrot.slane %v1654, %v1667
          %v1669 = vcombine.high %v1661, %v1661
          %1670 = vrot.lane.b32.xlu0 %v1661, 113
          %v1671 = vpop.permute.xlu0 %1670
          %1672 = vrot.lane.b32.xlu0 %v1669, 113
          %v1673 = vpop.permute.xlu0 %1672
          %1674 = vrot.lane.b32.xlu0 %v1668, 113
          %v1675 = vpop.permute.xlu0 %1674
          %vm1676 = vcmask 924672
          %v1677 = vsel %vm1676, %v1671, %v1673
          %v1678 = vsel %vm1676, %v1673, %v1675
          %v1681 = vsel %vm503, %v1677, 0.0
          %v1682 = vsel %vm504, %v1678, 0.0
          %v1683 = vld [vmem:[%s0] sm:$0x3]
          %1685 = vset.pattern.permute.xlu0 30
          %1686 = vperm.xlu0 %1685, %v1683
          %v1687 = vpop.permute.xlu0 %1686
          %v1689 = vmul.f32 %v1687, %v1681
          %v1690 = vmul.f32 %v1687, %v1682
          %v1691 = vadd.f32 %v1650, %v1689
          %v1692 = vadd.f32 %v1651, %v1690
          %v1693 = vld [vmem:[#allocation2 + $0x2] sm:$0x3f]
          %1694 = vset.pattern.permute.xlu0 31
          %1695 = vperm.xlu0 %1694, %v1683
          %v1696 = vpop.permute.xlu0 %1695
          %v1699 = vcombine.high %v1693, %v1693
          %v1701 = vunpack.c.l.s4 1983009808
          %v1702 = vunpack.c.0.s8 %v1701
          %v1703 = vlaneseq
          %v1704 = vshrl.u32 %v1703, 7
          %v1705 = vsub.s32 %v1702, %v1704
          %v1706 = vrot.slane %v1693, %v1705
          %v1708 = vunpack.c.l.s4 1983009808
          %v1709 = vunpack.c.0.s8 %v1708
          %v1710 = vlaneseq
          %v1711 = vshrl.u32 %v1710, 7
          %v1712 = vsub.s32 %v1709, %v1711
          %v1713 = vrot.slane %v1699, %v1712
          %v1714 = vcombine.high %v1706, %v1706
          %1715 = vrot.lane.b32.xlu0 %v1706, 112
          %v1716 = vpop.permute.xlu0 %1715
          %1717 = vrot.lane.b32.xlu0 %v1714, 112
          %v1718 = vpop.permute.xlu0 %1717
          %1719 = vrot.lane.b32.xlu0 %v1713, 112
          %v1720 = vpop.permute.xlu0 %1719
          %vm1721 = vcmask 916480
          %v1722 = vsel %vm1721, %v1716, %v1718
          %v1723 = vsel %vm1721, %v1718, %v1720
          %v1726 = vmul.f32 %v1696, %v1722
          %v1727 = vmul.f32 %v1696, %v1723
          %v1728 = vadd.f32 %v1691, %v1726
          %v1729 = vadd.f32 %v1692, %v1727
          %v1730 = vld [vmem:[#allocation2 + $0x2] sm:$0x3f]
          %v1732 = vcombine.high %v1730, %v1730
          %v1734 = vunpack.c.l.s4 1983009808
          %v1735 = vunpack.c.0.s8 %v1734
          %v1736 = vlaneseq
          %v1737 = vshrl.u32 %v1736, 7
          %v1738 = vsub.s32 %v1735, %v1737
          %v1739 = vrot.slane %v1730, %v1738
          %v1741 = vunpack.c.l.s4 1983009808
          %v1742 = vunpack.c.0.s8 %v1741
          %v1743 = vlaneseq
          %v1744 = vshrl.u32 %v1743, 7
          %v1745 = vsub.s32 %v1742, %v1744
          %v1746 = vrot.slane %v1732, %v1745
          %v1747 = vcombine.high %v1739, %v1739
          %1748 = vrot.lane.b32.xlu0 %v1739, 111
          %v1749 = vpop.permute.xlu0 %1748
          %1750 = vrot.lane.b32.xlu0 %v1747, 111
          %v1751 = vpop.permute.xlu0 %1750
          %1752 = vrot.lane.b32.xlu0 %v1746, 111
          %v1753 = vpop.permute.xlu0 %1752
          %vm1754 = vcmask 908288
          %v1755 = vsel %vm1754, %v1749, %v1751
          %v1756 = vsel %vm1754, %v1751, %v1753
          %v1759 = vsel %vm592, %v1755, 0.0
          %v1760 = vsel %vm593, %v1756, 0.0
          %v1761 = vld [vmem:[%s0] sm:$0x3]
          %1763 = vset.pattern.permute.xlu0 32
          %1764 = vperm.xlu0 %1763, %v1761
          %v1765 = vpop.permute.xlu0 %1764
          %v1767 = vmul.f32 %v1765, %v1759
          %v1768 = vmul.f32 %v1765, %v1760
          %v1769 = vadd.f32 %v1728, %v1767
          %v1770 = vadd.f32 %v1729, %v1768
          %v1771 = vld [vmem:[#allocation2 + $0x2] sm:$0x3f]
          %v1773 = vcombine.high %v1771, %v1771
          %v1775 = vunpack.c.l.s4 1983009808
          %v1776 = vunpack.c.0.s8 %v1775
          %v1777 = vlaneseq
          %v1778 = vshrl.u32 %v1777, 7
          %v1779 = vsub.s32 %v1776, %v1778
          %v1780 = vrot.slane %v1771, %v1779
          %v1782 = vunpack.c.l.s4 1983009808
          %v1783 = vunpack.c.0.s8 %v1782
          %v1784 = vlaneseq
          %v1785 = vshrl.u32 %v1784, 7
          %v1786 = vsub.s32 %v1783, %v1785
          %v1787 = vrot.slane %v1773, %v1786
          %v1788 = vcombine.high %v1780, %v1780
          %1789 = vrot.lane.b32.xlu0 %v1780, 110
          %v1790 = vpop.permute.xlu0 %1789
          %1791 = vrot.lane.b32.xlu0 %v1788, 110
          %v1792 = vpop.permute.xlu0 %1791
          %1793 = vrot.lane.b32.xlu0 %v1787, 110
          %v1794 = vpop.permute.xlu0 %1793
          %vm1795 = vcmask 900096
          %v1796 = vsel %vm1795, %v1790, %v1792
          %v1797 = vsel %vm1795, %v1792, %v1794
          %v1800 = vsel %vm644, %v1796, 0.0
          %v1801 = vsel %vm645, %v1797, 0.0
          %v1802 = vld [vmem:[%s0] sm:$0x3]
          %1804 = vset.pattern.permute.xlu0 33
          %1805 = vperm.xlu0 %1804, %v1802
          %v1806 = vpop.permute.xlu0 %1805
          %v1808 = vmul.f32 %v1806, %v1800
          %v1809 = vmul.f32 %v1806, %v1801
          %v1810 = vadd.f32 %v1769, %v1808
          %v1811 = vadd.f32 %v1770, %v1809
          %v1812 = vld [vmem:[#allocation2 + $0x2] sm:$0x3f]
          %v1814 = vcombine.high %v1812, %v1812
          %v1816 = vunpack.c.l.s4 1983009808
          %v1817 = vunpack.c.0.s8 %v1816
          %v1818 = vlaneseq
          %v1819 = vshrl.u32 %v1818, 7
          %v1820 = vsub.s32 %v1817, %v1819
          %v1821 = vrot.slane %v1812, %v1820
          %v1823 = vunpack.c.l.s4 1983009808
          %v1824 = vunpack.c.0.s8 %v1823
          %v1825 = vlaneseq
          %v1826 = vshrl.u32 %v1825, 7
          %v1827 = vsub.s32 %v1824, %v1826
          %v1828 = vrot.slane %v1814, %v1827
          %v1829 = vcombine.high %v1821, %v1821
          %1830 = vrot.lane.b32.xlu0 %v1821, 109
          %v1831 = vpop.permute.xlu0 %1830
          %1832 = vrot.lane.b32.xlu0 %v1829, 109
          %v1833 = vpop.permute.xlu0 %1832
          %1834 = vrot.lane.b32.xlu0 %v1828, 109
          %v1835 = vpop.permute.xlu0 %1834
          %vm1836 = vcmask 891904
          %v1837 = vsel %vm1836, %v1831, %v1833
          %v1838 = vsel %vm1836, %v1833, %v1835
          %v1841 = vsel %vm696, %v1837, 0.0
          %v1842 = vsel %vm697, %v1838, 0.0
          %v1843 = vld [vmem:[%s0] sm:$0x3]
          %1845 = vset.pattern.permute.xlu0 34
          %1846 = vperm.xlu0 %1845, %v1843
          %v1847 = vpop.permute.xlu0 %1846
          %v1849 = vmul.f32 %v1847, %v1841
          %v1850 = vmul.f32 %v1847, %v1842
          %v1851 = vadd.f32 %v1810, %v1849
          %v1852 = vadd.f32 %v1811, %v1850
          %v1853 = vld [vmem:[#allocation2 + $0x2] sm:$0x3f]
          %v1855 = vcombine.high %v1853, %v1853
          %v1857 = vunpack.c.l.s4 1983009808
          %v1858 = vunpack.c.0.s8 %v1857
          %v1859 = vlaneseq
          %v1860 = vshrl.u32 %v1859, 7
          %v1861 = vsub.s32 %v1858, %v1860
          %v1862 = vrot.slane %v1853, %v1861
          %v1864 = vunpack.c.l.s4 1983009808
          %v1865 = vunpack.c.0.s8 %v1864
          %v1866 = vlaneseq
          %v1867 = vshrl.u32 %v1866, 7
          %v1868 = vsub.s32 %v1865, %v1867
          %v1869 = vrot.slane %v1855, %v1868
          %v1870 = vcombine.high %v1862, %v1862
          %1871 = vrot.lane.b32.xlu0 %v1862, 99
          %v1872 = vpop.permute.xlu0 %1871
          %1873 = vrot.lane.b32.xlu0 %v1870, 99
          %v1874 = vpop.permute.xlu0 %1873
          %1875 = vrot.lane.b32.xlu0 %v1869, 99
          %v1876 = vpop.permute.xlu0 %1875
          %vm1877 = vcmask 809984
          %v1878 = vsel %vm1877, %v1872, %v1874
          %v1879 = vsel %vm1877, %v1874, %v1876
          %v1882 = vsel %vm399, %v1878, 0.0
          %v1883 = vsel %vm400, %v1879, 0.0
          %v1884 = vld [vmem:[%s0] sm:$0x3]
          %1886 = vset.pattern.permute.xlu0 35
          %1887 = vperm.xlu0 %1886, %v1884
          %v1888 = vpop.permute.xlu0 %1887
          %v1890 = vmul.f32 %v1888, %v1882
          %v1891 = vmul.f32 %v1888, %v1883
          %v1892 = vadd.f32 %v1851, %v1890
          %v1893 = vadd.f32 %v1852, %v1891
          %v1894 = vld [vmem:[#allocation2 + $0x2] sm:$0x3f]
          %v1896 = vcombine.high %v1894, %v1894
          %v1898 = vunpack.c.l.s4 1983009808
          %v1899 = vunpack.c.0.s8 %v1898
          %v1900 = vlaneseq
          %v1901 = vshrl.u32 %v1900, 7
          %v1902 = vsub.s32 %v1899, %v1901
          %v1903 = vrot.slane %v1894, %v1902
          %v1905 = vunpack.c.l.s4 1983009808
          %v1906 = vunpack.c.0.s8 %v1905
          %v1907 = vlaneseq
          %v1908 = vshrl.u32 %v1907, 7
          %v1909 = vsub.s32 %v1906, %v1908
          %v1910 = vrot.slane %v1896, %v1909
          %v1911 = vcombine.high %v1903, %v1903
          %1912 = vrot.lane.b32.xlu0 %v1903, 98
          %v1913 = vpop.permute.xlu0 %1912
          %1914 = vrot.lane.b32.xlu0 %v1911, 98
          %v1915 = vpop.permute.xlu0 %1914
          %1916 = vrot.lane.b32.xlu0 %v1910, 98
          %v1917 = vpop.permute.xlu0 %1916
          %vm1918 = vcmask 801792
          %v1919 = vsel %vm1918, %v1913, %v1915
          %v1920 = vsel %vm1918, %v1915, %v1917
          %v1923 = vsel %vm451, %v1919, 0.0
          %v1924 = vsel %vm452, %v1920, 0.0
          %v1925 = vld [vmem:[%s0] sm:$0x3]
          %1927 = vset.pattern.permute.xlu0 36
          %1928 = vperm.xlu0 %1927, %v1925
          %v1929 = vpop.permute.xlu0 %1928
          %v1931 = vmul.f32 %v1929, %v1923
          %v1932 = vmul.f32 %v1929, %v1924
          %v1933 = vadd.f32 %v1892, %v1931
          %v1934 = vadd.f32 %v1893, %v1932
          %v1935 = vld [vmem:[#allocation2 + $0x2] sm:$0x3f]
          %v1937 = vcombine.high %v1935, %v1935
          %v1939 = vunpack.c.l.s4 1983009808
          %v1940 = vunpack.c.0.s8 %v1939
          %v1941 = vlaneseq
          %v1942 = vshrl.u32 %v1941, 7
          %v1943 = vsub.s32 %v1940, %v1942
          %v1944 = vrot.slane %v1935, %v1943
          %v1946 = vunpack.c.l.s4 1983009808
          %v1947 = vunpack.c.0.s8 %v1946
          %v1948 = vlaneseq
          %v1949 = vshrl.u32 %v1948, 7
          %v1950 = vsub.s32 %v1947, %v1949
          %v1951 = vrot.slane %v1937, %v1950
          %v1952 = vcombine.high %v1944, %v1944
          %1953 = vrot.lane.b32.xlu0 %v1944, 97
          %v1954 = vpop.permute.xlu0 %1953
          %1955 = vrot.lane.b32.xlu0 %v1952, 97
          %v1956 = vpop.permute.xlu0 %1955
          %1957 = vrot.lane.b32.xlu0 %v1951, 97
          %v1958 = vpop.permute.xlu0 %1957
          %vm1959 = vcmask 793600
          %v1960 = vsel %vm1959, %v1954, %v1956
          %v1961 = vsel %vm1959, %v1956, %v1958
          %v1964 = vsel %vm503, %v1960, 0.0
          %v1965 = vsel %vm504, %v1961, 0.0
          %v1966 = vld [vmem:[%s0] sm:$0x3]
          %1968 = vset.pattern.permute.xlu0 37
          %1969 = vperm.xlu0 %1968, %v1966
          %v1970 = vpop.permute.xlu0 %1969
          %v1972 = vmul.f32 %v1970, %v1964
          %v1973 = vmul.f32 %v1970, %v1965
          %v1974 = vadd.f32 %v1933, %v1972
          %v1975 = vadd.f32 %v1934, %v1973
          %v1976 = vld [vmem:[#allocation2 + $0x2] sm:$0x3f]
          %1977 = vset.pattern.permute.xlu0 38
          %1978 = vperm.xlu0 %1977, %v1966
          %v1979 = vpop.permute.xlu0 %1978
          %v1982 = vcombine.high %v1976, %v1976
          %v1984 = vunpack.c.l.s4 1983009808
          %v1985 = vunpack.c.0.s8 %v1984
          %v1986 = vlaneseq
          %v1987 = vshrl.u32 %v1986, 7
          %v1988 = vsub.s32 %v1985, %v1987
          %v1989 = vrot.slane %v1976, %v1988
          %v1991 = vunpack.c.l.s4 1983009808
          %v1992 = vunpack.c.0.s8 %v1991
          %v1993 = vlaneseq
          %v1994 = vshrl.u32 %v1993, 7
          %v1995 = vsub.s32 %v1992, %v1994
          %v1996 = vrot.slane %v1982, %v1995
          %v1997 = vcombine.high %v1989, %v1989
          %1998 = vrot.lane.b32.xlu0 %v1989, 96
          %v1999 = vpop.permute.xlu0 %1998
          %2000 = vrot.lane.b32.xlu0 %v1997, 96
          %v2001 = vpop.permute.xlu0 %2000
          %2002 = vrot.lane.b32.xlu0 %v1996, 96
          %v2003 = vpop.permute.xlu0 %2002
          %vm2004 = vcmask 785408
          %v2005 = vsel %vm2004, %v1999, %v2001
          %v2006 = vsel %vm2004, %v2001, %v2003
          %v2009 = vmul.f32 %v1979, %v2005
          %v2010 = vmul.f32 %v1979, %v2006
          %v2011 = vadd.f32 %v1974, %v2009
          %v2012 = vadd.f32 %v1975, %v2010
          %v2013 = vld [vmem:[#allocation2 + $0x2] sm:$0x3f]
          %v2015 = vcombine.high %v2013, %v2013
          %v2017 = vunpack.c.l.s4 1983009808
          %v2018 = vunpack.c.0.s8 %v2017
          %v2019 = vlaneseq
          %v2020 = vshrl.u32 %v2019, 7
          %v2021 = vsub.s32 %v2018, %v2020
          %v2022 = vrot.slane %v2013, %v2021
          %v2024 = vunpack.c.l.s4 1983009808
          %v2025 = vunpack.c.0.s8 %v2024
          %v2026 = vlaneseq
          %v2027 = vshrl.u32 %v2026, 7
          %v2028 = vsub.s32 %v2025, %v2027
          %v2029 = vrot.slane %v2015, %v2028
          %v2030 = vcombine.high %v2022, %v2022
          %2031 = vrot.lane.b32.xlu0 %v2022, 95
          %v2032 = vpop.permute.xlu0 %2031
          %2033 = vrot.lane.b32.xlu0 %v2030, 95
          %v2034 = vpop.permute.xlu0 %2033
          %2035 = vrot.lane.b32.xlu0 %v2029, 95
          %v2036 = vpop.permute.xlu0 %2035
          %vm2037 = vcmask 777216
          %v2038 = vsel %vm2037, %v2032, %v2034
          %v2039 = vsel %vm2037, %v2034, %v2036
          %v2042 = vsel %vm592, %v2038, 0.0
          %v2043 = vsel %vm593, %v2039, 0.0
          %v2044 = vld [vmem:[%s0] sm:$0x3]
          %2046 = vset.pattern.permute.xlu0 39
          %2047 = vperm.xlu0 %2046, %v2044
          %v2048 = vpop.permute.xlu0 %2047
          %v2050 = vmul.f32 %v2048, %v2042
          %v2051 = vmul.f32 %v2048, %v2043
          %v2052 = vadd.f32 %v2011, %v2050
          %v2053 = vadd.f32 %v2012, %v2051
          %v2054 = vld [vmem:[#allocation2 + $0x2] sm:$0x3f]
          %v2056 = vcombine.high %v2054, %v2054
          %v2058 = vunpack.c.l.s4 1983009808
          %v2059 = vunpack.c.0.s8 %v2058
          %v2060 = vlaneseq
          %v2061 = vshrl.u32 %v2060, 7
          %v2062 = vsub.s32 %v2059, %v2061
          %v2063 = vrot.slane %v2054, %v2062
          %v2065 = vunpack.c.l.s4 1983009808
          %v2066 = vunpack.c.0.s8 %v2065
          %v2067 = vlaneseq
          %v2068 = vshrl.u32 %v2067, 7
          %v2069 = vsub.s32 %v2066, %v2068
          %v2070 = vrot.slane %v2056, %v2069
          %v2071 = vcombine.high %v2063, %v2063
          %2072 = vrot.lane.b32.xlu0 %v2063, 94
          %v2073 = vpop.permute.xlu0 %2072
          %2074 = vrot.lane.b32.xlu0 %v2071, 94
          %v2075 = vpop.permute.xlu0 %2074
          %2076 = vrot.lane.b32.xlu0 %v2070, 94
          %v2077 = vpop.permute.xlu0 %2076
          %vm2078 = vcmask 769024
          %v2079 = vsel %vm2078, %v2073, %v2075
          %v2080 = vsel %vm2078, %v2075, %v2077
          %v2083 = vsel %vm644, %v2079, 0.0
          %v2084 = vsel %vm645, %v2080, 0.0
          %v2085 = vld [vmem:[%s0] sm:$0x3]
          %2087 = vset.pattern.permute.xlu0 40
          %2088 = vperm.xlu0 %2087, %v2085
          %v2089 = vpop.permute.xlu0 %2088
          %v2091 = vmul.f32 %v2089, %v2083
          %v2092 = vmul.f32 %v2089, %v2084
          %v2093 = vadd.f32 %v2052, %v2091
          %v2094 = vadd.f32 %v2053, %v2092
          %v2095 = vld [vmem:[#allocation2 + $0x2] sm:$0x3f]
          %v2097 = vcombine.high %v2095, %v2095
          %v2099 = vunpack.c.l.s4 1983009808
          %v2100 = vunpack.c.0.s8 %v2099
          %v2101 = vlaneseq
          %v2102 = vshrl.u32 %v2101, 7
          %v2103 = vsub.s32 %v2100, %v2102
          %v2104 = vrot.slane %v2095, %v2103
          %v2106 = vunpack.c.l.s4 1983009808
          %v2107 = vunpack.c.0.s8 %v2106
          %v2108 = vlaneseq
          %v2109 = vshrl.u32 %v2108, 7
          %v2110 = vsub.s32 %v2107, %v2109
          %v2111 = vrot.slane %v2097, %v2110
          %v2112 = vcombine.high %v2104, %v2104
          %2113 = vrot.lane.b32.xlu0 %v2104, 93
          %v2114 = vpop.permute.xlu0 %2113
          %2115 = vrot.lane.b32.xlu0 %v2112, 93
          %v2116 = vpop.permute.xlu0 %2115
          %2117 = vrot.lane.b32.xlu0 %v2111, 93
          %v2118 = vpop.permute.xlu0 %2117
          %vm2119 = vcmask 760832
          %v2120 = vsel %vm2119, %v2114, %v2116
          %v2121 = vsel %vm2119, %v2116, %v2118
          %v2124 = vsel %vm696, %v2120, 0.0
          %v2125 = vsel %vm697, %v2121, 0.0
          %v2126 = vld [vmem:[%s0] sm:$0x3]
          %2128 = vset.pattern.permute.xlu0 41
          %2129 = vperm.xlu0 %2128, %v2126
          %v2130 = vpop.permute.xlu0 %2129
          %v2132 = vmul.f32 %v2130, %v2124
          %v2133 = vmul.f32 %v2130, %v2125
          %v2134 = vadd.f32 %v2093, %v2132
          %v2135 = vadd.f32 %v2094, %v2133
          %v2136 = vld [vmem:[#allocation2 + $0x2] sm:$0x3f]
          %v2138 = vcombine.high %v2136, %v2136
          %v2140 = vunpack.c.l.s4 1983009808
          %v2141 = vunpack.c.0.s8 %v2140
          %v2142 = vlaneseq
          %v2143 = vshrl.u32 %v2142, 7
          %v2144 = vsub.s32 %v2141, %v2143
          %v2145 = vrot.slane %v2136, %v2144
          %v2147 = vunpack.c.l.s4 1983009808
          %v2148 = vunpack.c.0.s8 %v2147
          %v2149 = vlaneseq
          %v2150 = vshrl.u32 %v2149, 7
          %v2151 = vsub.s32 %v2148, %v2150
          %v2152 = vrot.slane %v2138, %v2151
          %v2153 = vcombine.high %v2145, %v2145
          %2154 = vrot.lane.b32.xlu0 %v2145, 83
          %v2155 = vpop.permute.xlu0 %2154
          %2156 = vrot.lane.b32.xlu0 %v2153, 83
          %v2157 = vpop.permute.xlu0 %2156
          %2158 = vrot.lane.b32.xlu0 %v2152, 83
          %v2159 = vpop.permute.xlu0 %2158
          %vm2160 = vcmask 678912
          %v2161 = vsel %vm2160, %v2155, %v2157
          %v2162 = vsel %vm2160, %v2157, %v2159
          %v2165 = vsel %vm399, %v2161, 0.0
          %v2166 = vsel %vm400, %v2162, 0.0
          %v2167 = vld [vmem:[%s0] sm:$0x3]
          %2169 = vset.pattern.permute.xlu0 42
          %2170 = vperm.xlu0 %2169, %v2167
          %v2171 = vpop.permute.xlu0 %2170
          %v2173 = vmul.f32 %v2171, %v2165
          %v2174 = vmul.f32 %v2171, %v2166
          %v2175 = vadd.f32 %v2134, %v2173
          %v2176 = vadd.f32 %v2135, %v2174
          %v2177 = vld [vmem:[#allocation2 + $0x2] sm:$0x3f]
          %v2179 = vcombine.high %v2177, %v2177
          %v2181 = vunpack.c.l.s4 1983009808
          %v2182 = vunpack.c.0.s8 %v2181
          %v2183 = vlaneseq
          %v2184 = vshrl.u32 %v2183, 7
          %v2185 = vsub.s32 %v2182, %v2184
          %v2186 = vrot.slane %v2177, %v2185
          %v2188 = vunpack.c.l.s4 1983009808
          %v2189 = vunpack.c.0.s8 %v2188
          %v2190 = vlaneseq
          %v2191 = vshrl.u32 %v2190, 7
          %v2192 = vsub.s32 %v2189, %v2191
          %v2193 = vrot.slane %v2179, %v2192
          %v2194 = vcombine.high %v2186, %v2186
          %2195 = vrot.lane.b32.xlu0 %v2186, 82
          %v2196 = vpop.permute.xlu0 %2195
          %2197 = vrot.lane.b32.xlu0 %v2194, 82
          %v2198 = vpop.permute.xlu0 %2197
          %2199 = vrot.lane.b32.xlu0 %v2193, 82
          %v2200 = vpop.permute.xlu0 %2199
          %vm2201 = vcmask 670720
          %v2202 = vsel %vm2201, %v2196, %v2198
          %v2203 = vsel %vm2201, %v2198, %v2200
          %v2206 = vsel %vm451, %v2202, 0.0
          %v2207 = vsel %vm452, %v2203, 0.0
          %v2208 = vld [vmem:[%s0] sm:$0x3]
          %2210 = vset.pattern.permute.xlu0 43
          %2211 = vperm.xlu0 %2210, %v2208
          %v2212 = vpop.permute.xlu0 %2211
          %v2214 = vmul.f32 %v2212, %v2206
          %v2215 = vmul.f32 %v2212, %v2207
          %v2216 = vadd.f32 %v2175, %v2214
          %v2217 = vadd.f32 %v2176, %v2215
          %v2218 = vld [vmem:[#allocation2 + $0x2] sm:$0x3f]
          %v2220 = vcombine.high %v2218, %v2218
          %v2222 = vunpack.c.l.s4 1983009808
          %v2223 = vunpack.c.0.s8 %v2222
          %v2224 = vlaneseq
          %v2225 = vshrl.u32 %v2224, 7
          %v2226 = vsub.s32 %v2223, %v2225
          %v2227 = vrot.slane %v2218, %v2226
          %v2229 = vunpack.c.l.s4 1983009808
          %v2230 = vunpack.c.0.s8 %v2229
          %v2231 = vlaneseq
          %v2232 = vshrl.u32 %v2231, 7
          %v2233 = vsub.s32 %v2230, %v2232
          %v2234 = vrot.slane %v2220, %v2233
          %v2235 = vcombine.high %v2227, %v2227
          %2236 = vrot.lane.b32.xlu0 %v2227, 81
          %v2237 = vpop.permute.xlu0 %2236
          %2238 = vrot.lane.b32.xlu0 %v2235, 81
          %v2239 = vpop.permute.xlu0 %2238
          %2240 = vrot.lane.b32.xlu0 %v2234, 81
          %v2241 = vpop.permute.xlu0 %2240
          %vm2242 = vcmask 662528
          %v2243 = vsel %vm2242, %v2237, %v2239
          %v2244 = vsel %vm2242, %v2239, %v2241
          %v2247 = vsel %vm503, %v2243, 0.0
          %v2248 = vsel %vm504, %v2244, 0.0
          %v2249 = vld [vmem:[%s0] sm:$0x3]
          %2251 = vset.pattern.permute.xlu0 44
          %2252 = vperm.xlu0 %2251, %v2249
          %v2253 = vpop.permute.xlu0 %2252
          %v2255 = vmul.f32 %v2253, %v2247
          %v2256 = vmul.f32 %v2253, %v2248
          %v2257 = vadd.f32 %v2216, %v2255
          %v2258 = vadd.f32 %v2217, %v2256
          %v2259 = vld [vmem:[#allocation2 + $0x2] sm:$0x3f]
          %2260 = vset.pattern.permute.xlu0 45
          %2261 = vperm.xlu0 %2260, %v2249
          %v2262 = vpop.permute.xlu0 %2261
          %v2265 = vcombine.high %v2259, %v2259
          %v2267 = vunpack.c.l.s4 1983009808
          %v2268 = vunpack.c.0.s8 %v2267
          %v2269 = vlaneseq
          %v2270 = vshrl.u32 %v2269, 7
          %v2271 = vsub.s32 %v2268, %v2270
          %v2272 = vrot.slane %v2259, %v2271
          %v2274 = vunpack.c.l.s4 1983009808
          %v2275 = vunpack.c.0.s8 %v2274
          %v2276 = vlaneseq
          %v2277 = vshrl.u32 %v2276, 7
          %v2278 = vsub.s32 %v2275, %v2277
          %v2279 = vrot.slane %v2265, %v2278
          %v2280 = vcombine.high %v2272, %v2272
          %2281 = vrot.lane.b32.xlu0 %v2272, 80
          %v2282 = vpop.permute.xlu0 %2281
          %2283 = vrot.lane.b32.xlu0 %v2280, 80
          %v2284 = vpop.permute.xlu0 %2283
          %2285 = vrot.lane.b32.xlu0 %v2279, 80
          %v2286 = vpop.permute.xlu0 %2285
          %vm2287 = vcmask 654336
          %v2288 = vsel %vm2287, %v2282, %v2284
          %v2289 = vsel %vm2287, %v2284, %v2286
          %v2292 = vmul.f32 %v2262, %v2288
          %v2293 = vmul.f32 %v2262, %v2289
          %v2294 = vadd.f32 %v2257, %v2292
          %v2295 = vadd.f32 %v2258, %v2293
          %v2296 = vld [vmem:[#allocation2 + $0x2] sm:$0x3f]
          %v2298 = vcombine.high %v2296, %v2296
          %v2300 = vunpack.c.l.s4 1983009808
          %v2301 = vunpack.c.0.s8 %v2300
          %v2302 = vlaneseq
          %v2303 = vshrl.u32 %v2302, 7
          %v2304 = vsub.s32 %v2301, %v2303
          %v2305 = vrot.slane %v2296, %v2304
          %v2307 = vunpack.c.l.s4 1983009808
          %v2308 = vunpack.c.0.s8 %v2307
          %v2309 = vlaneseq
          %v2310 = vshrl.u32 %v2309, 7
          %v2311 = vsub.s32 %v2308, %v2310
          %v2312 = vrot.slane %v2298, %v2311
          %v2313 = vcombine.high %v2305, %v2305
          %2314 = vrot.lane.b32.xlu0 %v2305, 79
          %v2315 = vpop.permute.xlu0 %2314
          %2316 = vrot.lane.b32.xlu0 %v2313, 79
          %v2317 = vpop.permute.xlu0 %2316
          %2318 = vrot.lane.b32.xlu0 %v2312, 79
          %v2319 = vpop.permute.xlu0 %2318
          %vm2320 = vcmask 646144
          %v2321 = vsel %vm2320, %v2315, %v2317
          %v2322 = vsel %vm2320, %v2317, %v2319
          %v2325 = vsel %vm592, %v2321, 0.0
          %v2326 = vsel %vm593, %v2322, 0.0
          %v2327 = vld [vmem:[%s0] sm:$0x3]
          %2329 = vset.pattern.permute.xlu0 46
          %2330 = vperm.xlu0 %2329, %v2327
          %v2331 = vpop.permute.xlu0 %2330
          %v2333 = vmul.f32 %v2331, %v2325
          %v2334 = vmul.f32 %v2331, %v2326
          %v2335 = vadd.f32 %v2294, %v2333
          %v2336 = vadd.f32 %v2295, %v2334
          %v2337 = vld [vmem:[#allocation2 + $0x2] sm:$0x3f]
          %v2339 = vcombine.high %v2337, %v2337
          %v2341 = vunpack.c.l.s4 1983009808
          %v2342 = vunpack.c.0.s8 %v2341
          %v2343 = vlaneseq
          %v2344 = vshrl.u32 %v2343, 7
          %v2345 = vsub.s32 %v2342, %v2344
          %v2346 = vrot.slane %v2337, %v2345
          %v2348 = vunpack.c.l.s4 1983009808
          %v2349 = vunpack.c.0.s8 %v2348
          %v2350 = vlaneseq
          %v2351 = vshrl.u32 %v2350, 7
          %v2352 = vsub.s32 %v2349, %v2351
          %v2353 = vrot.slane %v2339, %v2352
          %v2354 = vcombine.high %v2346, %v2346
          %2355 = vrot.lane.b32.xlu0 %v2346, 78
          %v2356 = vpop.permute.xlu0 %2355
          %2357 = vrot.lane.b32.xlu0 %v2354, 78
          %v2358 = vpop.permute.xlu0 %2357
          %2359 = vrot.lane.b32.xlu0 %v2353, 78
          %v2360 = vpop.permute.xlu0 %2359
          %vm2361 = vcmask 637952
          %v2362 = vsel %vm2361, %v2356, %v2358
          %v2363 = vsel %vm2361, %v2358, %v2360
          %v2366 = vsel %vm644, %v2362, 0.0
          %v2367 = vsel %vm645, %v2363, 0.0
          %v2368 = vld [vmem:[%s0] sm:$0x3]
          %2370 = vset.pattern.permute.xlu0 47
          %2371 = vperm.xlu0 %2370, %v2368
          %v2372 = vpop.permute.xlu0 %2371
          %v2374 = vmul.f32 %v2372, %v2366
          %v2375 = vmul.f32 %v2372, %v2367
          %v2376 = vadd.f32 %v2335, %v2374
          %v2377 = vadd.f32 %v2336, %v2375
          %v2378 = vld [vmem:[#allocation2 + $0x2] sm:$0x3f]
          %v2380 = vcombine.high %v2378, %v2378
          %v2382 = vunpack.c.l.s4 1983009808
          %v2383 = vunpack.c.0.s8 %v2382
          %v2384 = vlaneseq
          %v2385 = vshrl.u32 %v2384, 7
          %v2386 = vsub.s32 %v2383, %v2385
          %v2387 = vrot.slane %v2378, %v2386
          %v2389 = vunpack.c.l.s4 1983009808
          %v2390 = vunpack.c.0.s8 %v2389
          %v2391 = vlaneseq
          %v2392 = vshrl.u32 %v2391, 7
          %v2393 = vsub.s32 %v2390, %v2392
          %v2394 = vrot.slane %v2380, %v2393
          %v2395 = vcombine.high %v2387, %v2387
          %2396 = vrot.lane.b32.xlu0 %v2387, 77
          %v2397 = vpop.permute.xlu0 %2396
          %2398 = vrot.lane.b32.xlu0 %v2395, 77
          %v2399 = vpop.permute.xlu0 %2398
          %2400 = vrot.lane.b32.xlu0 %v2394, 77
          %v2401 = vpop.permute.xlu0 %2400
          %vm2402 = vcmask 629760
          %v2403 = vsel %vm2402, %v2397, %v2399
          %v2404 = vsel %vm2402, %v2399, %v2401
          %v2407 = vsel %vm696, %v2403, 0.0
          %v2408 = vsel %vm697, %v2404, 0.0
          %v2409 = vld [vmem:[%s0] sm:$0x3]
          %2411 = vset.pattern.permute.xlu0 48
          %2412 = vperm.xlu0 %2411, %v2409
          %v2413 = vpop.permute.xlu0 %2412
          %v2415 = vmul.f32 %v2413, %v2407
          %v2416 = vmul.f32 %v2413, %v2408
          %v2417 = vadd.f32 %v2376, %v2415
          %v2418 = vadd.f32 %v2377, %v2416
          %vm2419 = vcmask 1041408
          %v2420 = vsel %vm2419, %v2417, 0.0
          %v2421 = vrot.slane %v2420, 4
          %v2422 = vadd.f32 %v2420, %v2421
          %v2423 = vrot.slane %v2422, 2
          %v2424 = vadd.f32 %v2422, %v2423
          %v2425 = vrot.slane %v2424, 1
          %v2426 = vadd.f32 %v2424, %v2425
          %v2427 = vsel %vm2419, %v2418, 0.0
          %v2428 = vrot.slane %v2427, 4
          %v2429 = vadd.f32 %v2427, %v2428
          %v2430 = vrot.slane %v2429, 2
          %v2431 = vadd.f32 %v2429, %v2430
          %v2432 = vrot.slane %v2431, 1
          %v2433 = vadd.f32 %v2431, %v2432
          %s2434 = sld [smem:[#allocation3]]
          %v2435 = vstv %s2434
          %v2436 = vadd.f32 %v2426, %v2435
          %v2437 = vadd.f32 %v2433, %v2435
          %v2438 = vxor.u32 %v2436, 2147483648
          %v2439 = vxor.u32 %v2437, 2147483648
          %v2440 = vmul.f32 %v2438, 1.442695
          %v2441 = vpow.pop %v2440
          %v2442 = vmul.f32 %v2439, 1.442695
          %v2443 = vpow.pop %v2442
          %v2444 = vadd.f32 %v2441, 1.0
          %v2445 = vadd.f32 %v2443, 1.0
          %v2446 = vrcp.pop %v2444
          %v2447 = vmul.f32 1.0, %v2446
          %v2448 = vrcp.pop %v2445
          %v2449 = vmul.f32 1.0, %v2448
          %v2452 = vcombine.low %v2447, %v2449
          %v2454 = vunpack.c.l.s4 1966171168
          %v2455 = vunpack.c.0.s8 %v2454
          %v2456 = vlaneseq
          %v2457 = vshrl.u32 %v2456, 7
          %v2458 = vsub.s32 %v2455, %v2457
          %v2459 = vrot.slane %v2452, %v2458
          %v2461 = vunpack.c.l.s4 1966171168
          %v2462 = vunpack.c.0.s8 %v2461
          %v2463 = vlaneseq
          %v2464 = vshrl.u32 %v2463, 7
          %v2465 = vsub.s32 %v2462, %v2464
          %v2466 = vrot.slane %v2459, %v2465
          %v2468 = vlaneseq
          %vm2469 = vcmp.ge.s32.totalorder %v2468, 0
          %vm2470 = vcmp.lt.s32.totalorder %v2468, 256
          %vm2471 = vmand %vm2469, %vm2470
          %2472 = vst.msk [vmem:[%s243] sm:$0x3] %vm2471, %v2466
        $region56: #{tpu_custom_call.1} parent=35 // pred_fallthru
          _
        %s2473 = sand.u32 %s134, 1
        %s2474 = scalar_lea.sflag [#allocation6], %s2473
        %s2475 = sand.u32 %s134, 1
        %s2476 = smul.addr %s2475, 2
        %s2477 = scalar_lea.vmem [#allocation9], %s2476
        // Predicated region
        $region57: #{tpu_custom_call.1} parent=35 // pred_check
          %p2478 = pneg %p144
        $region58: #{tpu_custom_call.1} parent=35 // pred_check_branch
          %2480 = sbr.rel (%p2478) target = $region60
        $region59: #{tpu_custom_call.1} parent=35 // pred_region
          %s2482 = ssub.s32 32, 32
          %2483 = vsyncadd %s2474, %s2482
          %s2484 = smul.addr %s27, 2
          %s2485 = smul.addr %s2484, 16
          %s2486 = scalar_lea.hbm %s4, %s2485
          %s2488 = sshll.u32 %s2477, 4
          %s2489 = int_to_ptr.vmem [resolvable:$true] %s2488
          %2491 = dma.vmem_to_hbm [thread:$0]  %s2489, 32, %s2486, %s2474
        $region60: #{tpu_custom_call.1} parent=35 // pred_fallthru
          _
      $region36: #{tpu_custom_call.1} parent=5 // pred_fallthru
        _
      %p2492 = scmp.le.s32.totalorder 2, %s18
      // Predicated region
      $region61: #{tpu_custom_call.1} parent=5 // pred_check
        %p2493 = pneg %p2492
      $region62: #{tpu_custom_call.1} parent=5 // pred_check_branch
        %2495 = sbr.rel (%p2493) target = $region64
      $region63: #{tpu_custom_call.1} parent=5 // pred_region
        %s2496 = ssub.s32 %s18, 2
        // Predicated region
        $region65: #{tpu_custom_call.1} parent=63 // pred_check
          %p2497 = pneg %p150
        $region66: #{tpu_custom_call.1} parent=63 // pred_check_branch
          %2499 = sbr.rel (%p2497) target = $region68
        $region67: #{tpu_custom_call.1} parent=63 // pred_region
          %s2500 = sand.u32 %s135, 1
          %s2501 = scalar_lea.sflag [#allocation6], %s2500
          %s2502 = sand.u32 %s135, 1
          %s2503 = smul.addr %s2502, 2
          %s2504 = scalar_lea.vmem [#allocation9], %s2503
          %2505 = dma.done %s2501, 32
        $region68: #{tpu_custom_call.1} parent=63 // pred_fallthru
          _
      $region64: #{tpu_custom_call.1} parent=5 // pred_fallthru
        _
    $region6: #{tpu_custom_call.1} parent=1 // loop_footer
      %s22 = sadd.s32 1, %s18
    $region7: #{tpu_custom_call.1} parent=1 // loop_footer_branch
      %17 = sbr.rel target = $region3
    $region8: #{tpu_custom_call.1} parent=1 // loop_exit
      _
    %2506 = vsyncpa [#allocation5], 1
    %s2507 = scalar_lea.sflag [#allocation5], 1
    %2508 = vsyncpa %s2507, 1
    %2509 = vsyncpa [#allocation8], 1
    %s2510 = scalar_lea.sflag [#allocation8], 1
    %2511 = vsyncpa %s2510, 1
    %2512 = vsyncpa [#allocation6], 1
    %s2513 = scalar_lea.sflag [#allocation6], 1
    %2514 = vsyncpa %s2513, 1

</llo_original>
